<compile_context>
chip_gen: v7x
topology: tpu7x:2x2x1
jax: 0.10.0
libtpu: 0.0.40
codegen_flags: <defaults>
</compile_context>

<pallas_src>
import functools
import math

import jax
import jax.numpy as jnp
from jax.experimental import pallas as pl
from jax.experimental.pallas import tpu as pltpu

LN_EPS = 1e-12  # pytorch_pretrained_bert BertLayerNorm default


def _layer_norm(y, gamma, beta):
    mu = jnp.mean(y, axis=-1, keepdims=True)
    var = jnp.mean((y - mu) ** 2, axis=-1, keepdims=True)
    return (y - mu) * jax.lax.rsqrt(var + LN_EPS) * gamma + beta


def _erf(x):
    # Abramowitz & Stegun 7.1.26 rational approximation (max abs err 1.5e-7):
    # exact-GELU parity using only exp / mul / add / select (all Mosaic-safe).
    a1, a2, a3, a4, a5 = 0.254829592, -0.284496736, 1.421413741, -1.453152027, 1.061405429
    p = 0.3275911
    sgn = jnp.where(x >= 0.0, 1.0, -1.0)
    ax = jnp.abs(x)
    t = 1.0 / (1.0 + p * ax)
    poly = ((((a5 * t + a4) * t + a3) * t + a2) * t + a1) * t
    return sgn * (1.0 - poly * jnp.exp(-ax * ax))


def _gelu_exact(x):
    # BertIntermediate uses exact erf GELU (not the tanh approximation).
    return 0.5 * x * (1.0 + _erf(x * (1.0 / math.sqrt(2.0))))


def bert_layer_kernel(*refs, num_heads, head_dim, separate_kv, output_attentions):
    it = iter(refs)
    xq_ref = next(it)                                   # (1, tq, H) query/residual tile
    xkv_ref = next(it) if separate_kv else None         # (1, S, H) full sequence
    mask_ref = next(it)                                 # (1, 1, S) additive mask
    wqkv_ref = next(it); bqkv_ref = next(it)            # fused QKV (Q pre-scaled)
    wo_ref = next(it); bo_ref = next(it)                # attention output dense
    ln1_g_ref = next(it); ln1_b_ref = next(it)
    wi_ref = next(it); bi_ref = next(it)                # intermediate dense
    wo2_ref = next(it); bo2_ref = next(it)              # output dense
    ln2_g_ref = next(it); ln2_b_ref = next(it)
    out_ref = next(it)
    attn_ref = next(it) if output_attentions else None
    kv_scratch = next(it) if separate_kv else None      # (S, 2H) bf16 VMEM cache

    H = num_heads * head_dim
    x_q = xq_ref[0]                                     # (tq, H) f32
    mask = mask_ref[0]                                  # (1, S)
    x_q_bf = x_q.astype(jnp.bfloat16)

    # --- BertSelfAttention: fused QKV projection ---
    if not separate_kv:
        # Query tile == full sequence: one fused x @ W_qkv matmul.
        qkv = (jnp.dot(x_q_bf, wqkv_ref[...], preferred_element_type=jnp.float32)
               + bqkv_ref[...])                         # (S, 3H)
        q = qkv[:, :H]                                  # 1/sqrt(d) folded into W_q host-side
        k = qkv[:, H:2 * H].astype(jnp.bfloat16)
        v = qkv[:, 2 * H:].astype(jnp.bfloat16)
    else:
        w_qkv = wqkv_ref[...]
        b_qkv = bqkv_ref[...]
        # Q from the query tile only.
        q = (jnp.dot(x_q_bf, w_qkv[:, :H], preferred_element_type=jnp.float32)
             + b_qkv[:, :H])
        # K/V over the FULL sequence: compute once per batch element
        # (first query tile), cache in persistent VMEM, reuse for later tiles.
        @pl.when(pl.program_id(1) == 0)
        def _():
            x_kv_bf = xkv_ref[0].astype(jnp.bfloat16)
            kv = (jnp.dot(x_kv_bf, w_qkv[:, H:], preferred_element_type=jnp.float32)
                  + b_qkv[:, H:])
            kv_scratch[...] = kv.astype(jnp.bfloat16)
        kv_full = kv_scratch[...]
        k = kv_full[:, :H]
        v = kv_full[:, H:]

    tq = q.shape[0]
    s_kv = k.shape[0]

    # Heads become the batch dim of batched matmuls (no per-head loop/concat).
    qh = jnp.swapaxes(q.reshape(tq, num_heads, head_dim), 0, 1).astype(jnp.bfloat16)
    kh = jnp.swapaxes(k.reshape(s_kv, num_heads, head_dim), 0, 1)
    vh = jnp.swapaxes(v.reshape(s_kv, num_heads, head_dim), 0, 1)

    # scores[h, q, k] = (q/sqrt(d)) . k   (scale already folded into Q)
    scores = jnp.einsum("hqd,hkd->hqk", qh, kh,
                        preferred_element_type=jnp.float32)       # (heads, tq, S)
    scores = scores + mask[None]

    # Softmax in f32; denominator reciprocal on the EUP slot.
    m = jnp.max(scores, axis=-1, keepdims=True)
    e = jnp.exp(scores - m)
    denom = jnp.sum(e, axis=-1, keepdims=True)
    probs = e * pl.reciprocal(denom, approx=True)                 # (heads, tq, S)

    if output_attentions:
        attn_ref[0] = probs                                       # single lane-dense store

    # dropout(attention_probs) is identity in eval mode.
    ctx = jnp.einsum("hqk,hkd->hqd", probs.astype(jnp.bfloat16), vh,
                     preferred_element_type=jnp.float32)          # (heads, tq, d)
    ctx = jnp.swapaxes(ctx, 0, 1).reshape(tq, H)                  # (tq, H)

    # --- BertSelfOutput: dense + residual + LayerNorm (f32) ---
    attn_out = (jnp.dot(ctx.astype(jnp.bfloat16), wo_ref[...],
                        preferred_element_type=jnp.float32) + bo_ref[...])
    h1 = _layer_norm(attn_out + x_q, ln1_g_ref[...], ln1_b_ref[...])

    # --- BertIntermediate: dense + exact-erf GELU ---
    inter = (jnp.dot(h1.astype(jnp.bfloat16), wi_ref[...],
                     preferred_element_type=jnp.float32) + bi_ref[...])
    inter = _gelu_exact(inter)

    # --- BertOutput: dense + residual + LayerNorm (f32) ---
    ff = (jnp.dot(inter.astype(jnp.bfloat16), wo2_ref[...],
                  preferred_element_type=jnp.float32) + bo2_ref[...])
    out_ref[0] = _layer_norm(ff + h1, ln2_g_ref[...], ln2_b_ref[...])


@functools.partial(jax.jit, static_argnames=("num_heads", "output_attentions"))
def bert_layer_pallas(x, mask, params, num_heads, output_attentions=True):
    """One BertLayer forward.  Returns (layer_output, attention_probs) or just
    layer_output when output_attentions=False."""
    B, S, H = x.shape
    I = params["wi"].shape[1]
    head_dim = H // num_heads

    # Query-tile size: full sequence for small S, 128/256-row tiles otherwise.
    tq = 256 if S % 256 == 0 else (128 if S % 128 == 0 else S)
    n_q = S // tq
    separate_kv = tq < S

    # Host-side weight prep: fuse QKV, fold 1/sqrt(d) into the Q columns and
    # cast MXU operands to bf16.  Biases / LayerNorm params stay f32.
    scale = 1.0 / math.sqrt(head_dim)
    mm = jnp.bfloat16
    w_qkv = jnp.concatenate(
        [params["wq"] * scale, params["wk"], params["wv"]], axis=1).astype(mm)
    b_qkv = jnp.concatenate(
        [params["bq"] * scale, params["bk"], params["bv"]], axis=1)
    wo = params["wo"].astype(mm)
    wi = params["wi"].astype(mm)
    wo2 = params["wo2"].astype(mm)

    def rep(shape):  # weight / bias blocks: same (whole-array) block every step
        n = len(shape)
        return pl.BlockSpec(shape, lambda b, qi, _n=n: (0,) * _n)

    in_specs = [pl.BlockSpec((1, tq, H), lambda b, qi: (b, qi, 0))]   # query tile
    operands = [x]
    if separate_kv:                                                   # full-seq K/V input
        in_specs.append(pl.BlockSpec((1, S, H), lambda b, qi: (b, 0, 0)))
        operands.append(x)
    in_specs += [
        pl.BlockSpec((1, 1, S), lambda b, qi: (b, 0, 0)),             # additive mask
        rep((H, 3 * H)), rep((1, 3 * H)),                             # fused QKV
        rep((H, H)), rep((1, H)),                                     # attn output dense
        rep((1, H)), rep((1, H)),                                     # LayerNorm 1
        rep((H, I)), rep((1, I)),                                     # intermediate dense
        rep((I, H)), rep((1, H)),                                     # output dense
        rep((1, H)), rep((1, H)),                                     # LayerNorm 2
    ]
    operands += [
        mask, w_qkv, b_qkv,
        wo, params["bo"], params["ln1_g"], params["ln1_b"],
        wi, params["bi"], wo2, params["bo2"], params["ln2_g"], params["ln2_b"],
    ]

    hidden_struct = jax.ShapeDtypeStruct((B, S, H), jnp.float32)
    hidden_spec = pl.BlockSpec((1, tq, H), lambda b, qi: (b, qi, 0))
    if output_attentions:
        out_shape = (hidden_struct,
                     jax.ShapeDtypeStruct((B, num_heads, S, S), jnp.float32))
        out_specs = (hidden_spec,
                     pl.BlockSpec((1, num_heads, tq, S), lambda b, qi: (b, 0, qi, 0)))
    else:
        out_shape = hidden_struct
        out_specs = hidden_spec

    scratch_shapes = []
    if separate_kv:
        scratch_shapes.append(pltpu.VMEM((S, 2 * H), jnp.bfloat16))   # cached K/V

    kernel = functools.partial(
        bert_layer_kernel, num_heads=num_heads, head_dim=head_dim,
        separate_kv=separate_kv, output_attentions=output_attentions)

    # qi must stay sequential per batch element when the K/V cache is live.
    qi_sem = "arbitrary" if separate_kv else "parallel"

    result = pl.pallas_call(
        kernel,
        out_shape=out_shape,
        grid=(B, n_q),
        in_specs=in_specs,
        out_specs=out_specs,
        scratch_shapes=tuple(scratch_shapes),
        compiler_params=pltpu.CompilerParams(
            dimension_semantics=("parallel", qi_sem),
            vmem_limit_bytes=64 * 1024 * 1024,
        ),
    )(*operands)
    return result


def bert_layer_reference(x, mask, params, num_heads):
    """Pure-JAX f32 reference of the PyTorch BertLayer forward."""
    B, S, H = x.shape
    d = H // num_heads

    def split(t):
        return t.reshape(B, S, num_heads, d).transpose(0, 2, 1, 3)

    q = split(x @ params["wq"] + params["bq"])
    k = split(x @ params["wk"] + params["bk"])
    v = split(x @ params["wv"] + params["bv"])
    scores = jnp.einsum("bhqd,bhkd->bhqk", q, k) / math.sqrt(d)
    scores = scores + mask[:, None, :, :]                 # (B,1,1,S) broadcast
    probs = jax.nn.softmax(scores, axis=-1)
    ctx = jnp.einsum("bhqk,bhkd->bhqd", probs, v)
    ctx = ctx.transpose(0, 2, 1, 3).reshape(B, S, H)
    attn_out = ctx @ params["wo"] + params["bo"]
    h1 = _layer_norm(attn_out + x, params["ln1_g"], params["ln1_b"])
    inter = jax.nn.gelu(h1 @ params["wi"] + params["bi"], approximate=False)
    ff = inter @ params["wo2"] + params["bo2"]
    out = _layer_norm(ff + h1, params["ln2_g"], params["ln2_b"])
    return out, probs


def init_params(key, hidden, intermediate):
    # Deterministic synthetic parameters.  Weights stored as (in, out); the
    # kernel computes x @ W + b, equivalent to nn.Linear semantics.
    ks = jax.random.split(key, 12)
    n = lambda k, s, scale=0.02: scale * jax.random.normal(k, s, jnp.float32)
    return {
        "wq": n(ks[0], (hidden, hidden)), "bq": n(ks[1], (1, hidden)),
        "wk": n(ks[2], (hidden, hidden)), "bk": n(ks[3], (1, hidden)),
        "wv": n(ks[4], (hidden, hidden)), "bv": n(ks[5], (1, hidden)),
        "wo": n(ks[6], (hidden, hidden)), "bo": n(ks[7], (1, hidden)),
        "ln1_g": jnp.ones((1, hidden), jnp.float32),
        "ln1_b": jnp.zeros((1, hidden), jnp.float32),
        "wi": n(ks[8], (hidden, intermediate)), "bi": n(ks[9], (1, intermediate)),
        "wo2": n(ks[10], (intermediate, hidden)), "bo2": n(ks[11], (1, hidden)),
        "ln2_g": jnp.ones((1, hidden), jnp.float32),
        "ln2_b": jnp.zeros((1, hidden), jnp.float32),
    }


if __name__ == "__main__":
    key = jax.random.PRNGKey(0)
    k_x, k_p, k_x2 = jax.random.split(key, 3)

    NUM_HEADS, INTERMEDIATE = 4, 64

    # ---- Case 1: tiny shapes, full-sequence query tile -----------------
    B, S, H = 2, 8, 32
    hidden_states = jax.random.normal(k_x, (B, S, H), jnp.float32)
    valid = jnp.ones((B, S), jnp.float32).at[1, -2:].set(0.0)
    attention_mask = ((1.0 - valid) * -10000.0)[:, None, :]          # (B, 1, S)
    params = init_params(k_p, H, INTERMEDIATE)

    layer_out, attn_probs = bert_layer_pallas(
        hidden_states, attention_mask, params,
        num_heads=NUM_HEADS, output_attentions=True)
    jax.block_until_ready((layer_out, attn_probs))

    ref_out, ref_probs = bert_layer_reference(hidden_states, attention_mask,
                                              params, NUM_HEADS)
    assert layer_out.shape == (B, S, H)
    assert attn_probs.shape == (B, NUM_HEADS, S, S)
    assert bool(jnp.all(jnp.isfinite(layer_out)))
    assert float(jnp.max(jnp.abs(layer_out - ref_out))) < 5e-2
    assert float(jnp.max(jnp.abs(attn_probs - ref_probs))) < 2e-2

    # Attention-probs-free variant (skips the (B, heads, S, S) HBM write).
    layer_out_noattn = bert_layer_pallas(
        hidden_states, attention_mask, params,
        num_heads=NUM_HEADS, output_attentions=False)
    jax.block_until_ready(layer_out_noattn)
    assert bool(jnp.allclose(layer_out, layer_out_noattn, atol=1e-4, rtol=1e-4))

    # ---- Case 2: longer sequence -> query tiling + cached K/V ----------
    B2, S2 = 2, 512
    x2 = jax.random.normal(k_x2, (B2, S2, H), jnp.float32)
    valid2 = jnp.ones((B2, S2), jnp.float32).at[1, -7:].set(0.0)
    mask2 = ((1.0 - valid2) * -10000.0)[:, None, :]
    out2, probs2 = bert_layer_pallas(x2, mask2, params, num_heads=NUM_HEADS,
                                     output_attentions=True)
    jax.block_until_ready((out2, probs2))
    ref_out2, ref_probs2 = bert_layer_reference(x2, mask2, params, NUM_HEADS)
    assert float(jnp.max(jnp.abs(out2 - ref_out2))) < 5e-2
    assert float(jnp.max(jnp.abs(probs2 - ref_probs2))) < 2e-2

    print("KERNEL_OK")
</pallas_src>

<mosaic_0001>
module attributes {stable_mosaic.version = 11 : i64} {
  func.func @bert_layer_kernel(%arg0: i32, %arg1: i32, %arg2: memref<1x8x32xf32, #tpu.memory_space<vmem>>, %arg3: memref<1x1x8xf32, #tpu.memory_space<vmem>>, %arg4: memref<32x96xbf16, #tpu.memory_space<vmem>>, %arg5: memref<1x96xf32, #tpu.memory_space<vmem>>, %arg6: memref<32x32xbf16, #tpu.memory_space<vmem>>, %arg7: memref<1x32xf32, #tpu.memory_space<vmem>>, %arg8: memref<1x32xf32, #tpu.memory_space<vmem>>, %arg9: memref<1x32xf32, #tpu.memory_space<vmem>>, %arg10: memref<32x64xbf16, #tpu.memory_space<vmem>>, %arg11: memref<1x64xf32, #tpu.memory_space<vmem>>, %arg12: memref<64x32xbf16, #tpu.memory_space<vmem>>, %arg13: memref<1x32xf32, #tpu.memory_space<vmem>>, %arg14: memref<1x32xf32, #tpu.memory_space<vmem>>, %arg15: memref<1x32xf32, #tpu.memory_space<vmem>>, %arg16: memref<1x8x32xf32, #tpu.memory_space<vmem>>, %arg17: memref<1x4x8x8xf32, #tpu.memory_space<vmem>>) attributes {dimension_semantics = [#tpu.dimension_semantics<parallel>, #tpu.dimension_semantics<parallel>], iteration_bounds = array<i64: 2, 1>, scalar_prefetch = 0 : i64, scratch_operands = 0 : i64, tpu.core_type = #tpu.core_type<tc>, window_params = [{transform_indices = @transform_0, window_bounds = array<i64: 1, 8, 32>}, {transform_indices = @transform_1, window_bounds = array<i64: 1, 1, 8>}, {pipeline_mode = #tpu.pipeline_mode<synchronous>, transform_indices = @transform_2, window_bounds = array<i64: 32, 96>}, {pipeline_mode = #tpu.pipeline_mode<synchronous>, transform_indices = @transform_3, window_bounds = array<i64: 1, 96>}, {pipeline_mode = #tpu.pipeline_mode<synchronous>, transform_indices = @transform_4, window_bounds = array<i64: 32, 32>}, {pipeline_mode = #tpu.pipeline_mode<synchronous>, transform_indices = @transform_5, window_bounds = array<i64: 1, 32>}, {pipeline_mode = #tpu.pipeline_mode<synchronous>, transform_indices = @transform_6, window_bounds = array<i64: 1, 32>}, {pipeline_mode = #tpu.pipeline_mode<synchronous>, transform_indices = @transform_7, window_bounds = array<i64: 1, 32>}, {pipeline_mode = #tpu.pipeline_mode<synchronous>, transform_indices = @transform_8, window_bounds = array<i64: 32, 64>}, {pipeline_mode = #tpu.pipeline_mode<synchronous>, transform_indices = @transform_9, window_bounds = array<i64: 1, 64>}, {pipeline_mode = #tpu.pipeline_mode<synchronous>, transform_indices = @transform_10, window_bounds = array<i64: 64, 32>}, {pipeline_mode = #tpu.pipeline_mode<synchronous>, transform_indices = @transform_11, window_bounds = array<i64: 1, 32>}, {pipeline_mode = #tpu.pipeline_mode<synchronous>, transform_indices = @transform_12, window_bounds = array<i64: 1, 32>}, {pipeline_mode = #tpu.pipeline_mode<synchronous>, transform_indices = @transform_13, window_bounds = array<i64: 1, 32>}, {transform_indices = @transform_14, window_bounds = array<i64: 1, 8, 32>}, {transform_indices = @transform_15, window_bounds = array<i64: 1, 4, 8, 8>}]} {
    %c0 = arith.constant 0 : index
    %c0_0 = arith.constant 0 : index
    %c0_1 = arith.constant 0 : index
    %0 = vector.load %arg2[%c0, %c0_0, %c0_1] : memref<1x8x32xf32, #tpu.memory_space<vmem>>, vector<1x8x32xf32>
    %1 = vector.shape_cast %0 : vector<1x8x32xf32> to vector<8x32xf32>
    %c0_2 = arith.constant 0 : index
    %c0_3 = arith.constant 0 : index
    %c0_4 = arith.constant 0 : index
    %2 = vector.load %arg3[%c0_2, %c0_3, %c0_4] : memref<1x1x8xf32, #tpu.memory_space<vmem>>, vector<1x1x8xf32>
    %3 = vector.shape_cast %2 : vector<1x1x8xf32> to vector<1x8xf32>
    %4 = arith.truncf %1 : vector<8x32xf32> to vector<8x32xbf16>
    %c0_5 = arith.constant 0 : index
    %c0_6 = arith.constant 0 : index
    %5 = vector.load %arg4[%c0_5, %c0_6] : memref<32x96xbf16, #tpu.memory_space<vmem>>, vector<32x96xbf16>
    %cst = arith.constant dense<0.000000e+00> : vector<8x96xf32>
    %6 = tpu.matmul %4, %5, %cst {dimension_numbers = #tpu.dot_dimension_numbers<[1], [0], [0], [1], [0, 0, 1, 1], [], []>} : vector<8x32xbf16>, vector<32x96xbf16>, vector<8x96xf32> -> vector<8x96xf32>
    %c0_7 = arith.constant 0 : index
    %c0_8 = arith.constant 0 : index
    %7 = vector.load %arg5[%c0_7, %c0_8] : memref<1x96xf32, #tpu.memory_space<vmem>>, vector<1x96xf32>
    %8 = vector.broadcast %7 : vector<1x96xf32> to vector<8x96xf32>
    %9 = arith.addf %6, %8 : vector<8x96xf32>
    %10 = vector.extract_strided_slice %9 {offsets = [0, 0], sizes = [8, 32], strides = [1, 1]} : vector<8x96xf32> to vector<8x32xf32>
    %11 = vector.extract_strided_slice %9 {offsets = [0, 32], sizes = [8, 32], strides = [1, 1]} : vector<8x96xf32> to vector<8x32xf32>
    %12 = arith.truncf %11 : vector<8x32xf32> to vector<8x32xbf16>
    %13 = vector.extract_strided_slice %9 {offsets = [0, 64], sizes = [8, 32], strides = [1, 1]} : vector<8x96xf32> to vector<8x32xf32>
    %14 = arith.truncf %13 : vector<8x32xf32> to vector<8x32xbf16>
    %15 = vector.shape_cast %10 : vector<8x32xf32> to vector<8x4x8xf32>
    %16 = tpu.transpose %15, [1, 0, 2] : vector<8x4x8xf32> -> vector<4x8x8xf32>
    %17 = arith.truncf %16 : vector<4x8x8xf32> to vector<4x8x8xbf16>
    %18 = vector.shape_cast %12 : vector<8x32xbf16> to vector<8x4x8xbf16>
    %19 = tpu.transpose %18, [1, 0, 2] : vector<8x4x8xbf16> -> vector<4x8x8xbf16>
    %20 = vector.shape_cast %14 : vector<8x32xbf16> to vector<8x4x8xbf16>
    %21 = tpu.transpose %20, [1, 0, 2] : vector<8x4x8xbf16> -> vector<4x8x8xbf16>
    "tpu.trace_start"() <{level = 10 : i32, message = "hqd,hkd->hqk"}> : () -> ()
    %cst_9 = arith.constant dense<0.000000e+00> : vector<4x8x8xf32>
    %22 = tpu.matmul %17, %19, %cst_9 {dimension_numbers = #tpu.dot_dimension_numbers<[2], [2], [1], [1], [0, 0, 0, 1, 1, 1], [0], [0]>} : vector<4x8x8xbf16>, vector<4x8x8xbf16>, vector<4x8x8xf32> -> vector<4x8x8xf32>
    "tpu.trace_stop"() : () -> ()
    %23 = vector.shape_cast %3 : vector<1x8xf32> to vector<1x1x8xf32>
    %24 = vector.broadcast %23 : vector<1x1x8xf32> to vector<4x8x8xf32>
    %25 = arith.addf %22, %24 : vector<4x8x8xf32>
    %cst_10 = arith.constant dense<0xFF800000> : vector<4x8xf32>
    %26 = vector.multi_reduction <maximumf>, %25, %cst_10 [2] : vector<4x8x8xf32> to vector<4x8xf32>
    %27 = vector.shape_cast %26 : vector<4x8xf32> to vector<4x8x1xf32>
    %28 = vector.broadcast %27 : vector<4x8x1xf32> to vector<4x8x8xf32>
    %29 = arith.subf %25, %28 : vector<4x8x8xf32>
    %30 = math.exp %29 : vector<4x8x8xf32>
    %cst_11 = arith.constant dense<0.000000e+00> : vector<4x8xf32>
    %31 = vector.multi_reduction <add>, %30, %cst_11 [2] : vector<4x8x8xf32> to vector<4x8xf32>
    %32 = vector.shape_cast %31 : vector<4x8xf32> to vector<4x8x1xf32>
    %33 = tpu.reciprocal %32 {approx = true} : vector<4x8x1xf32> -> vector<4x8x1xf32>
    %34 = vector.broadcast %33 : vector<4x8x1xf32> to vector<4x8x8xf32>
    %35 = arith.mulf %30, %34 : vector<4x8x8xf32>
    %c0_12 = arith.constant 0 : index
    %c0_13 = arith.constant 0 : index
    %c0_14 = arith.constant 0 : index
    %c0_15 = arith.constant 0 : index
    %36 = vector.load %arg17[%c0_12, %c0_13, %c0_14, %c0_15] : memref<1x4x8x8xf32, #tpu.memory_space<vmem>>, vector<1x4x8x8xf32>
    %37 = vector.shape_cast %36 : vector<1x4x8x8xf32> to vector<4x8x8xf32>
    %38 = vector.shape_cast %35 : vector<4x8x8xf32> to vector<1x4x8x8xf32>
    tpu.vector_store %arg17[%c0_12, %c0_13, %c0_14, %c0_15], %38 {strides = array<i32>} : memref<1x4x8x8xf32, #tpu.memory_space<vmem>>, vector<1x4x8x8xf32>,
    %39 = arith.truncf %35 : vector<4x8x8xf32> to vector<4x8x8xbf16>
    "tpu.trace_start"() <{level = 10 : i32, message = "hqk,hkd->hqd"}> : () -> ()
    %cst_16 = arith.constant dense<0.000000e+00> : vector<4x8x8xf32>
    %40 = tpu.matmul %39, %21, %cst_16 {dimension_numbers = #tpu.dot_dimension_numbers<[2], [1], [1], [2], [0, 0, 0, 1, 1, 2], [0], [0]>} : vector<4x8x8xbf16>, vector<4x8x8xbf16>, vector<4x8x8xf32> -> vector<4x8x8xf32>
    "tpu.trace_stop"() : () -> ()
    %41 = tpu.transpose %40, [1, 0, 2] : vector<4x8x8xf32> -> vector<8x4x8xf32>
    %42 = vector.shape_cast %41 : vector<8x4x8xf32> to vector<8x32xf32>
    %43 = arith.truncf %42 : vector<8x32xf32> to vector<8x32xbf16>
    %c0_17 = arith.constant 0 : index
    %c0_18 = arith.constant 0 : index
    %44 = vector.load %arg6[%c0_17, %c0_18] : memref<32x32xbf16, #tpu.memory_space<vmem>>, vector<32x32xbf16>
    %cst_19 = arith.constant dense<0.000000e+00> : vector<8x32xf32>
    %45 = tpu.matmul %43, %44, %cst_19 {dimension_numbers = #tpu.dot_dimension_numbers<[1], [0], [0], [1], [0, 0, 1, 1], [], []>} : vector<8x32xbf16>, vector<32x32xbf16>, vector<8x32xf32> -> vector<8x32xf32>
    %c0_20 = arith.constant 0 : index
    %c0_21 = arith.constant 0 : index
    %46 = vector.load %arg7[%c0_20, %c0_21] : memref<1x32xf32, #tpu.memory_space<vmem>>, vector<1x32xf32>
    %47 = vector.broadcast %46 : vector<1x32xf32> to vector<8x32xf32>
    %48 = arith.addf %45, %47 : vector<8x32xf32>
    %49 = arith.addf %48, %1 : vector<8x32xf32>
    %c0_22 = arith.constant 0 : index
    %c0_23 = arith.constant 0 : index
    %50 = vector.load %arg8[%c0_22, %c0_23] : memref<1x32xf32, #tpu.memory_space<vmem>>, vector<1x32xf32>
    %c0_24 = arith.constant 0 : index
    %c0_25 = arith.constant 0 : index
    %51 = vector.load %arg9[%c0_24, %c0_25] : memref<1x32xf32, #tpu.memory_space<vmem>>, vector<1x32xf32>
    %cst_26 = arith.constant dense<0.000000e+00> : vector<8xf32>
    %52 = vector.multi_reduction <add>, %49, %cst_26 [1] : vector<8x32xf32> to vector<8xf32>
    %53 = vector.shape_cast %52 : vector<8xf32> to vector<8x1xf32>
    %cst_27 = arith.constant 3.200000e+01 : f32
    %54 = vector.broadcast %cst_27 : f32 to vector<8x1xf32>
    %55 = arith.divf %53, %54 : vector<8x1xf32>
    %56 = vector.broadcast %55 : vector<8x1xf32> to vector<8x32xf32>
    %57 = arith.subf %49, %56 : vector<8x32xf32>
    %58 = arith.mulf %57, %57 : vector<8x32xf32>
    %cst_28 = arith.constant dense<0.000000e+00> : vector<8xf32>
    %59 = vector.multi_reduction <add>, %58, %cst_28 [1] : vector<8x32xf32> to vector<8xf32>
    %60 = vector.shape_cast %59 : vector<8xf32> to vector<8x1xf32>
    %cst_29 = arith.constant 3.200000e+01 : f32
    %61 = vector.broadcast %cst_29 : f32 to vector<8x1xf32>
    %62 = arith.divf %60, %61 : vector<8x1xf32>
    %63 = vector.broadcast %55 : vector<8x1xf32> to vector<8x32xf32>
    %64 = arith.subf %49, %63 : vector<8x32xf32>
    %cst_30 = arith.constant 9.99999996E-13 : f32
    %65 = vector.broadcast %cst_30 : f32 to vector<8x1xf32>
    %66 = arith.addf %62, %65 : vector<8x1xf32>
    %67 = math.rsqrt %66 : vector<8x1xf32>
    %68 = vector.broadcast %67 : vector<8x1xf32> to vector<8x32xf32>
    %69 = arith.mulf %64, %68 : vector<8x32xf32>
    %70 = vector.broadcast %50 : vector<1x32xf32> to vector<8x32xf32>
    %71 = arith.mulf %69, %70 : vector<8x32xf32>
    %72 = vector.broadcast %51 : vector<1x32xf32> to vector<8x32xf32>
    %73 = arith.addf %71, %72 : vector<8x32xf32>
    %74 = arith.truncf %73 : vector<8x32xf32> to vector<8x32xbf16>
    %c0_31 = arith.constant 0 : index
    %c0_32 = arith.constant 0 : index
    %75 = vector.load %arg10[%c0_31, %c0_32] : memref<32x64xbf16, #tpu.memory_space<vmem>>, vector<32x64xbf16>
    %cst_33 = arith.constant dense<0.000000e+00> : vector<8x64xf32>
    %76 = tpu.matmul %74, %75, %cst_33 {dimension_numbers = #tpu.dot_dimension_numbers<[1], [0], [0], [1], [0, 0, 1, 1], [], []>} : vector<8x32xbf16>, vector<32x64xbf16>, vector<8x64xf32> -> vector<8x64xf32>
    %c0_34 = arith.constant 0 : index
    %c0_35 = arith.constant 0 : index
    %77 = vector.load %arg11[%c0_34, %c0_35] : memref<1x64xf32, #tpu.memory_space<vmem>>, vector<1x64xf32>
    %78 = vector.broadcast %77 : vector<1x64xf32> to vector<8x64xf32>
    %79 = arith.addf %76, %78 : vector<8x64xf32>
    %cst_36 = arith.constant 5.000000e-01 : f32
    %80 = vector.broadcast %cst_36 : f32 to vector<8x64xf32>
    %81 = arith.mulf %80, %79 : vector<8x64xf32>
    %cst_37 = arith.constant 0.707106769 : f32
    %82 = vector.broadcast %cst_37 : f32 to vector<8x64xf32>
    %83 = arith.mulf %79, %82 : vector<8x64xf32>
    %cst_38 = arith.constant 0.000000e+00 : f32
    %84 = vector.broadcast %cst_38 : f32 to vector<8x64xf32>
    %85 = arith.cmpf oge, %83, %84 : vector<8x64xf32>
    %cst_39 = arith.constant 1.000000e+00 : f32
    %cst_40 = arith.constant -1.000000e+00 : f32
    %86 = vector.broadcast %cst_39 : f32 to vector<8x64xf32>
    %87 = vector.broadcast %cst_40 : f32 to vector<8x64xf32>
    %88 = arith.select %85, %86, %87 : vector<8x64xi1>, vector<8x64xf32>
    %89 = math.absf %83 : vector<8x64xf32>
    %cst_41 = arith.constant 0.327591091 : f32
    %90 = vector.broadcast %cst_41 : f32 to vector<8x64xf32>
    %91 = arith.mulf %90, %89 : vector<8x64xf32>
    %cst_42 = arith.constant 1.000000e+00 : f32
    %92 = vector.broadcast %cst_42 : f32 to vector<8x64xf32>
    %93 = arith.addf %92, %91 : vector<8x64xf32>
    %cst_43 = arith.constant 1.000000e+00 : f32
    %94 = vector.broadcast %cst_43 : f32 to vector<8x64xf32>
    %95 = arith.divf %94, %93 : vector<8x64xf32>
    %cst_44 = arith.constant 1.06140542 : f32
    %96 = vector.broadcast %cst_44 : f32 to vector<8x64xf32>
    %97 = arith.mulf %96, %95 : vector<8x64xf32>
    %cst_45 = arith.constant -1.45315206 : f32
    %98 = vector.broadcast %cst_45 : f32 to vector<8x64xf32>
    %99 = arith.addf %97, %98 : vector<8x64xf32>
    %100 = arith.mulf %99, %95 : vector<8x64xf32>
    %cst_46 = arith.constant 1.42141378 : f32
    %101 = vector.broadcast %cst_46 : f32 to vector<8x64xf32>
    %102 = arith.addf %100, %101 : vector<8x64xf32>
    %103 = arith.mulf %102, %95 : vector<8x64xf32>
    %cst_47 = arith.constant -0.284496725 : f32
    %104 = vector.broadcast %cst_47 : f32 to vector<8x64xf32>
    %105 = arith.addf %103, %104 : vector<8x64xf32>
    %106 = arith.mulf %105, %95 : vector<8x64xf32>
    %cst_48 = arith.constant 0.254829586 : f32
    %107 = vector.broadcast %cst_48 : f32 to vector<8x64xf32>
    %108 = arith.addf %106, %107 : vector<8x64xf32>
    %109 = arith.mulf %108, %95 : vector<8x64xf32>
    %cst_49 = arith.constant 0.000000e+00 : f32
    %110 = vector.broadcast %cst_49 : f32 to vector<8x64xf32>
    %111 = arith.subf %110, %89 : vector<8x64xf32>
    %112 = arith.mulf %111, %89 : vector<8x64xf32>
    %113 = math.exp %112 : vector<8x64xf32>
    %114 = arith.mulf %109, %113 : vector<8x64xf32>
    %cst_50 = arith.constant 1.000000e+00 : f32
    %115 = vector.broadcast %cst_50 : f32 to vector<8x64xf32>
    %116 = arith.subf %115, %114 : vector<8x64xf32>
    %117 = arith.mulf %88, %116 : vector<8x64xf32>
    %cst_51 = arith.constant 1.000000e+00 : f32
    %118 = vector.broadcast %cst_51 : f32 to vector<8x64xf32>
    %119 = arith.addf %118, %117 : vector<8x64xf32>
    %120 = arith.mulf %81, %119 : vector<8x64xf32>
    %121 = arith.truncf %120 : vector<8x64xf32> to vector<8x64xbf16>
    %c0_52 = arith.constant 0 : index
    %c0_53 = arith.constant 0 : index
    %122 = vector.load %arg12[%c0_52, %c0_53] : memref<64x32xbf16, #tpu.memory_space<vmem>>, vector<64x32xbf16>
    %cst_54 = arith.constant dense<0.000000e+00> : vector<8x32xf32>
    %123 = tpu.matmul %121, %122, %cst_54 {dimension_numbers = #tpu.dot_dimension_numbers<[1], [0], [0], [1], [0, 0, 1, 1], [], []>} : vector<8x64xbf16>, vector<64x32xbf16>, vector<8x32xf32> -> vector<8x32xf32>
    %c0_55 = arith.constant 0 : index
    %c0_56 = arith.constant 0 : index
    %124 = vector.load %arg13[%c0_55, %c0_56] : memref<1x32xf32, #tpu.memory_space<vmem>>, vector<1x32xf32>
    %125 = vector.broadcast %124 : vector<1x32xf32> to vector<8x32xf32>
    %126 = arith.addf %123, %125 : vector<8x32xf32>
    %127 = arith.addf %126, %73 : vector<8x32xf32>
    %c0_57 = arith.constant 0 : index
    %c0_58 = arith.constant 0 : index
    %128 = vector.load %arg14[%c0_57, %c0_58] : memref<1x32xf32, #tpu.memory_space<vmem>>, vector<1x32xf32>
    %c0_59 = arith.constant 0 : index
    %c0_60 = arith.constant 0 : index
    %129 = vector.load %arg15[%c0_59, %c0_60] : memref<1x32xf32, #tpu.memory_space<vmem>>, vector<1x32xf32>
    %cst_61 = arith.constant dense<0.000000e+00> : vector<8xf32>
    %130 = vector.multi_reduction <add>, %127, %cst_61 [1] : vector<8x32xf32> to vector<8xf32>
    %131 = vector.shape_cast %130 : vector<8xf32> to vector<8x1xf32>
    %cst_62 = arith.constant 3.200000e+01 : f32
    %132 = vector.broadcast %cst_62 : f32 to vector<8x1xf32>
    %133 = arith.divf %131, %132 : vector<8x1xf32>
    %134 = vector.broadcast %133 : vector<8x1xf32> to vector<8x32xf32>
    %135 = arith.subf %127, %134 : vector<8x32xf32>
    %136 = arith.mulf %135, %135 : vector<8x32xf32>
    %cst_63 = arith.constant dense<0.000000e+00> : vector<8xf32>
    %137 = vector.multi_reduction <add>, %136, %cst_63 [1] : vector<8x32xf32> to vector<8xf32>
    %138 = vector.shape_cast %137 : vector<8xf32> to vector<8x1xf32>
    %cst_64 = arith.constant 3.200000e+01 : f32
    %139 = vector.broadcast %cst_64 : f32 to vector<8x1xf32>
    %140 = arith.divf %138, %139 : vector<8x1xf32>
    %141 = vector.broadcast %133 : vector<8x1xf32> to vector<8x32xf32>
    %142 = arith.subf %127, %141 : vector<8x32xf32>
    %cst_65 = arith.constant 9.99999996E-13 : f32
    %143 = vector.broadcast %cst_65 : f32 to vector<8x1xf32>
    %144 = arith.addf %140, %143 : vector<8x1xf32>
    %145 = math.rsqrt %144 : vector<8x1xf32>
    %146 = vector.broadcast %145 : vector<8x1xf32> to vector<8x32xf32>
    %147 = arith.mulf %142, %146 : vector<8x32xf32>
    %148 = vector.broadcast %128 : vector<1x32xf32> to vector<8x32xf32>
    %149 = arith.mulf %147, %148 : vector<8x32xf32>
    %150 = vector.broadcast %129 : vector<1x32xf32> to vector<8x32xf32>
    %151 = arith.addf %149, %150 : vector<8x32xf32>
    %c0_66 = arith.constant 0 : index
    %c0_67 = arith.constant 0 : index
    %c0_68 = arith.constant 0 : index
    %152 = vector.load %arg16[%c0_66, %c0_67, %c0_68] : memref<1x8x32xf32, #tpu.memory_space<vmem>>, vector<1x8x32xf32>
    %153 = vector.shape_cast %152 : vector<1x8x32xf32> to vector<8x32xf32>
    %154 = vector.shape_cast %151 : vector<8x32xf32> to vector<1x8x32xf32>
    tpu.vector_store %arg16[%c0_66, %c0_67, %c0_68], %154 {strides = array<i32>} : memref<1x8x32xf32, #tpu.memory_space<vmem>>, vector<1x8x32xf32>,
    return
  }
  func.func @transform_0(%arg0: i32, %arg1: i32) -> (i32, i32, i32) {
    %c0_i32 = arith.constant 0 : i32
    %c0_i32_0 = arith.constant 0 : i32
    return %arg0, %arg1, %c0_i32 : i32, i32, i32
  }
  func.func @transform_1(%arg0: i32, %arg1: i32) -> (i32, i32, i32) {
    %c0_i32 = arith.constant 0 : i32
    %c0_i32_0 = arith.constant 0 : i32
    %c0_i32_1 = arith.constant 0 : i32
    return %arg0, %c0_i32, %c0_i32_0 : i32, i32, i32
  }
  func.func @transform_2(%arg0: i32, %arg1: i32) -> (i32, i32) {
    %c0_i32 = arith.constant 0 : i32
    %c0_i32_0 = arith.constant 0 : i32
    %c0_i32_1 = arith.constant 0 : i32
    return %c0_i32, %c0_i32_0 : i32, i32
  }
  func.func @transform_3(%arg0: i32, %arg1: i32) -> (i32, i32) {
    %c0_i32 = arith.constant 0 : i32
    %c0_i32_0 = arith.constant 0 : i32
    %c0_i32_1 = arith.constant 0 : i32
    return %c0_i32, %c0_i32_0 : i32, i32
  }
  func.func @transform_4(%arg0: i32, %arg1: i32) -> (i32, i32) {
    %c0_i32 = arith.constant 0 : i32
    %c0_i32_0 = arith.constant 0 : i32
    %c0_i32_1 = arith.constant 0 : i32
    return %c0_i32, %c0_i32_0 : i32, i32
  }
  func.func @transform_5(%arg0: i32, %arg1: i32) -> (i32, i32) {
    %c0_i32 = arith.constant 0 : i32
    %c0_i32_0 = arith.constant 0 : i32
    %c0_i32_1 = arith.constant 0 : i32
    return %c0_i32, %c0_i32_0 : i32, i32
  }
  func.func @transform_6(%arg0: i32, %arg1: i32) -> (i32, i32) {
    %c0_i32 = arith.constant 0 : i32
    %c0_i32_0 = arith.constant 0 : i32
    %c0_i32_1 = arith.constant 0 : i32
    return %c0_i32, %c0_i32_0 : i32, i32
  }
  func.func @transform_7(%arg0: i32, %arg1: i32) -> (i32, i32) {
    %c0_i32 = arith.constant 0 : i32
    %c0_i32_0 = arith.constant 0 : i32
    %c0_i32_1 = arith.constant 0 : i32
    return %c0_i32, %c0_i32_0 : i32, i32
  }
  func.func @transform_8(%arg0: i32, %arg1: i32) -> (i32, i32) {
    %c0_i32 = arith.constant 0 : i32
    %c0_i32_0 = arith.constant 0 : i32
    %c0_i32_1 = arith.constant 0 : i32
    return %c0_i32, %c0_i32_0 : i32, i32
  }
  func.func @transform_9(%arg0: i32, %arg1: i32) -> (i32, i32) {
    %c0_i32 = arith.constant 0 : i32
    %c0_i32_0 = arith.constant 0 : i32
    %c0_i32_1 = arith.constant 0 : i32
    return %c0_i32, %c0_i32_0 : i32, i32
  }
  func.func @transform_10(%arg0: i32, %arg1: i32) -> (i32, i32) {
    %c0_i32 = arith.constant 0 : i32
    %c0_i32_0 = arith.constant 0 : i32
    %c0_i32_1 = arith.constant 0 : i32
    return %c0_i32, %c0_i32_0 : i32, i32
  }
  func.func @transform_11(%arg0: i32, %arg1: i32) -> (i32, i32) {
    %c0_i32 = arith.constant 0 : i32
    %c0_i32_0 = arith.constant 0 : i32
    %c0_i32_1 = arith.constant 0 : i32
    return %c0_i32, %c0_i32_0 : i32, i32
  }
  func.func @transform_12(%arg0: i32, %arg1: i32) -> (i32, i32) {
    %c0_i32 = arith.constant 0 : i32
    %c0_i32_0 = arith.constant 0 : i32
    %c0_i32_1 = arith.constant 0 : i32
    return %c0_i32, %c0_i32_0 : i32, i32
  }
  func.func @transform_13(%arg0: i32, %arg1: i32) -> (i32, i32) {
    %c0_i32 = arith.constant 0 : i32
    %c0_i32_0 = arith.constant 0 : i32
    %c0_i32_1 = arith.constant 0 : i32
    return %c0_i32, %c0_i32_0 : i32, i32
  }
  func.func @transform_14(%arg0: i32, %arg1: i32) -> (i32, i32, i32) {
    %c0_i32 = arith.constant 0 : i32
    %c0_i32_0 = arith.constant 0 : i32
    return %arg0, %arg1, %c0_i32 : i32, i32, i32
  }
  func.func @transform_15(%arg0: i32, %arg1: i32) -> (i32, i32, i32, i32) {
    %c0_i32 = arith.constant 0 : i32
    %c0_i32_0 = arith.constant 0 : i32
    %c0_i32_1 = arith.constant 0 : i32
    return %arg0, %c0_i32, %arg1, %c0_i32_0 : i32, i32, i32, i32
  }
}

</mosaic_0001>

<llo_original>
// kernel: bert_layer_pallas.1
$region0: #{bert_layer_pallas.1}
  #allocation0 [shape = 'u32[]', space=smem, size = 0x4, offset = 0x4, fixed_abs, tag = 'smem constant byte address 0x4 - core index']
  #allocation1 [shape = 'u32[144,128]{1,0:T(1,128)}', space=vmem, size = 0x12000, scoped, tag = 'internal scratch']
  %s0 = inlined_call_operand.hbm [shape: f32[2,8,32], index: 0, kind: input, shape index: {}]
  %s1 = inlined_call_operand.hbm [shape: f32[2,1,8], index: 1, kind: input, shape index: {}]
  %s2 = inlined_call_operand.hbm [shape: bf16[32,96], index: 2, kind: input, shape index: {}]
  %s3 = inlined_call_operand.hbm [shape: f32[1,96], index: 3, kind: input, shape index: {}]
  %s4 = inlined_call_operand.hbm [shape: bf16[32,32], index: 4, kind: input, shape index: {}]
  %s5 = inlined_call_operand.hbm [shape: f32[1,32], index: 5, kind: input, shape index: {}]
  %s6 = inlined_call_operand.hbm [shape: f32[1,32], index: 6, kind: input, shape index: {}]
  %s7 = inlined_call_operand.hbm [shape: f32[1,32], index: 7, kind: input, shape index: {}]
  %s8 = inlined_call_operand.hbm [shape: bf16[32,64], index: 8, kind: input, shape index: {}]
  %s9 = inlined_call_operand.hbm [shape: f32[1,64], index: 9, kind: input, shape index: {}]
  %s10 = inlined_call_operand.hbm [shape: bf16[64,32], index: 10, kind: input, shape index: {}]
  %s11 = inlined_call_operand.hbm [shape: f32[1,32], index: 11, kind: input, shape index: {}]
  %s12 = inlined_call_operand.hbm [shape: f32[1,32], index: 12, kind: input, shape index: {}]
  %s13 = inlined_call_operand.hbm [shape: f32[1,32], index: 13, kind: input, shape index: {}]
  %s14 = inlined_call_operand.hbm [shape: f32[2,8,32], index: 14, kind: output, shape index: {0}]
  %s15 = inlined_call_operand.hbm [shape: f32[2,4,8,8], index: 15, kind: output, shape index: {1}]
  %16 = xla_tuple %s14, %s15
  %s17 = sld [smem:[#allocation0]]
  $region153: #{bert_layer_pallas.1} parent=0
    _
  %s19 = ssub.s32 1, %s17
  %s20 = scalar_select 0, %s19, %s17
  $region1: #{bert_layer_pallas.1} parent=0
    #allocation2 [shape = 'u8[8192]{0}', space=vmem, size = 0x2000, scoped, tag = 'input window, operand 0']
    #allocation3 [shape = 's32[2]{0}', space=sflag, size = 0x8, scoped, tag = 'scoped memory for bert_layer_pallas.1']
    #allocation4 [shape = 's32[2]{0}', space=sflag, size = 0x8, scoped, tag = 'scoped memory for bert_layer_pallas.1']
    #allocation5 [shape = 'u8[1024]{0}', space=vmem, size = 0x400, scoped, tag = 'input window, operand 1']
    #allocation6 [shape = 's32[2]{0}', space=sflag, size = 0x8, scoped, tag = 'scoped memory for bert_layer_pallas.1']
    #allocation7 [shape = 'u8[8192]{0}', space=vmem, size = 0x2000, scoped, tag = 'input window, operand 2, single buffered']
    #allocation8 [shape = 'u8[512]{0}', space=vmem, size = 0x400, scoped, tag = 'input window, operand 3, single buffered']
    #allocation9 [shape = 's32[1]{0}', space=sflag, size = 0x4, scoped, tag = 'scoped memory for bert_layer_pallas.1']
    #allocation10 [shape = 'u8[8192]{0}', space=vmem, size = 0x2000, scoped, tag = 'input window, operand 4, single buffered']
    #allocation11 [shape = 'u8[512]{0}', space=vmem, size = 0x400, scoped, tag = 'input window, operand 5, single buffered']
    #allocation12 [shape = 's32[1]{0}', space=sflag, size = 0x4, scoped, tag = 'scoped memory for bert_layer_pallas.1']
    #allocation13 [shape = 'u8[512]{0}', space=vmem, size = 0x400, scoped, tag = 'input window, operand 6, single buffered']
    #allocation14 [shape = 'u8[512]{0}', space=vmem, size = 0x400, scoped, tag = 'input window, operand 7, single buffered']
    #allocation15 [shape = 's32[1]{0}', space=sflag, size = 0x4, scoped, tag = 'scoped memory for bert_layer_pallas.1']
    #allocation16 [shape = 'u8[8192]{0}', space=vmem, size = 0x2000, scoped, tag = 'input window, operand 8, single buffered']
    #allocation17 [shape = 'u8[512]{0}', space=vmem, size = 0x400, scoped, tag = 'input window, operand 9, single buffered']
    #allocation18 [shape = 's32[1]{0}', space=sflag, size = 0x4, scoped, tag = 'scoped memory for bert_layer_pallas.1']
    #allocation19 [shape = 'u8[16384]{0}', space=vmem, size = 0x4000, scoped, tag = 'input window, operand 10, single buffered']
    #allocation20 [shape = 'u8[512]{0}', space=vmem, size = 0x400, scoped, tag = 'input window, operand 11, single buffered']
    #allocation21 [shape = 's32[1]{0}', space=sflag, size = 0x4, scoped, tag = 'scoped memory for bert_layer_pallas.1']
    #allocation22 [shape = 'u8[512]{0}', space=vmem, size = 0x400, scoped, tag = 'input window, operand 12, single buffered']
    #allocation23 [shape = 'u8[512]{0}', space=vmem, size = 0x400, scoped, tag = 'input window, operand 13, single buffered']
    #allocation24 [shape = 's32[1]{0}', space=sflag, size = 0x4, scoped, tag = 'scoped memory for bert_layer_pallas.1']
    #allocation25 [shape = 'u8[8192]{0}', space=vmem, size = 0x2000, scoped, tag = 'output window, operand 0']
    #allocation26 [shape = 'u8[32768]{0}', space=vmem, size = 0x8000, scoped, tag = 'output window, operand 1']
    #allocation27 [shape = 's32[2]{0}', space=sflag, size = 0x8, scoped, tag = 'scoped memory for bert_layer_pallas.1']
    %21 = vsyncpa [#allocation3], 0
    %s22 = scalar_lea.sflag [#allocation3], 1
    %23 = vsyncpa %s22, 0
    %24 = vsyncpa [#allocation6], 0
    %s25 = scalar_lea.sflag [#allocation6], 1
    %26 = vsyncpa %s25, 0
    %27 = vsyncpa [#allocation9], 0
    %28 = vsyncpa [#allocation12], 0
    %29 = vsyncpa [#allocation15], 0
    %30 = vsyncpa [#allocation18], 0
    %31 = vsyncpa [#allocation21], 0
    %32 = vsyncpa [#allocation24], 0
    %33 = vsyncpa [#allocation4], 0
    %s34 = scalar_lea.sflag [#allocation4], 1
    %35 = vsyncpa %s34, 0
    %36 = vsyncpa [#allocation27], 0
    %s37 = scalar_lea.sflag [#allocation27], 1
    %38 = vsyncpa %s37, 0
    loop: start=0, step=1, limit=4
    $region2: #{bert_layer_pallas.1} parent=1 // loop_pre_header
      _
    $region3: #{bert_layer_pallas.1} parent=1 // loop_header
      %s40 = sphi 0, %s44
      %p41 = scmp.ge.s32.totalorder %s40, 4
      %s47 = sphi 0, %s59
      %s48 = sphi 0, %s55
      %s49 = sphi 0, %s47
      %s50 = sphi 0, %s48
      %s51 = sphi 0, %s49
      %s52 = sphi 0, %s50
      %s64 = sphi 0, %s66
      %s67 = sphi 0, %s64
      %s68 = sphi 0, %s67
      %s84 = sphi 0, %s68
      %s90 = sphi 0, %s92
      %s93 = sphi 0, %s90
      %s94 = sphi 0, %s93
      %s110 = sphi 0, %s94
      %s114 = sphi 0, %s114
      %s116 = sphi 0, %s114
      %s117 = sphi 0, %s116
      %s131 = sphi 0, %s117
      %s135 = sphi 0, %s135
      %s137 = sphi 0, %s135
      %s138 = sphi 0, %s137
      %s152 = sphi 0, %s138
      %s156 = sphi 0, %s156
      %s158 = sphi 0, %s156
      %s159 = sphi 0, %s158
      %s173 = sphi 0, %s159
      %s177 = sphi 0, %s177
      %s179 = sphi 0, %s177
      %s180 = sphi 0, %s179
      %s194 = sphi 0, %s180
      %s198 = sphi 0, %s198
      %s200 = sphi 0, %s198
      %s201 = sphi 0, %s200
      %s215 = sphi 0, %s201
      %s219 = sphi 0, %s219
      %s221 = sphi 0, %s219
      %s222 = sphi 0, %s221
      %s236 = sphi 0, %s222
      %s240 = sphi 0, %s240
      %s242 = sphi 0, %s240
      %s243 = sphi 0, %s242
      %s257 = sphi 0, %s243
      %s261 = sphi 0, %s261
      %s263 = sphi 0, %s261
      %s264 = sphi 0, %s263
      %s278 = sphi 0, %s264
      %s282 = sphi 0, %s282
      %s284 = sphi 0, %s282
      %s285 = sphi 0, %s284
      %s299 = sphi 0, %s285
      %s303 = sphi 0, %s303
      %s305 = sphi 0, %s303
      %s306 = sphi 0, %s305
      %s320 = sphi 0, %s306
      %s324 = sphi 0, %s324
      %s326 = sphi 0, %s324
      %s327 = sphi 0, %s326
      %s341 = sphi 0, %s327
      %s345 = sphi 0, %s345
      %s347 = sphi 0, %s345
      %s348 = sphi 0, %s347
      %s362 = sphi 0, %s348
      %s370 = sphi 0, %s372
      %s373 = sphi 0, %s370
      %s374 = sphi 0, %s373
      %s390 = sphi 0, %s374
      %s398 = sphi 0, %s400
      %s401 = sphi 0, %s398
      %s402 = sphi 0, %s401
      %s418 = sphi 0, %s402
    $region4: #{bert_layer_pallas.1} parent=1 // loop_header_branch
      %43 = sbr.rel (%p41) target = $region8
    $region5: #{bert_layer_pallas.1} parent=1 // loop_body
      %s45 = ssub.s32 %s40, 1
      %s46 = ssub.s32 %s40, 2
      %s53 = sadd.s32 1, %s48
      %p54 = scmp.ge.s32.totalorder %s53, 1
      %s55 = scalar_select %p54, 0, %s53
      %s56 = sadd.s32 1, %s47
      %s57 = scalar_select %p54, %s56, %s47
      %p58 = scmp.ge.s32.totalorder %s57, 2
      %s59 = scalar_select %p58, 0, %s57
      %s60 = ssub.s32 %s47, %s59
      %s61 = ssub.s32 %s48, %s55
      %s62 = sor.u32 %s60, %s61
      %p63 = scmp.eq.s32.totalorder %s62, 0
      %s65 = sadd.s32 %s64, 1
      %s66 = scalar_select %p63, %s64, %s65
      %p69 = pneg %p63
      %p70 = scmp.eq.s32.totalorder %s40, 1
      %p71 = por %p69, %p70
      %p72 = scmp.ne.s32.totalorder %s64, %s67
      %p73 = scmp.eq.s32.totalorder %s40, 0
      %p74 = por %p72, %p73
      %p75 = scmp.ne.s32.totalorder %s64, %s67
      %p76 = scmp.eq.s32.totalorder %s45, 1
      %p77 = por %p75, %p76
      %p78 = scmp.ne.s32.totalorder %s67, %s68
      %p79 = scmp.eq.s32.totalorder %s45, 0
      %p80 = por %p78, %p79
      %p81 = scmp.ne.s32.totalorder %s67, %s68
      %p82 = scmp.eq.s32.totalorder %s46, 1
      %p83 = por %p81, %p82
      %p85 = scmp.ne.s32.totalorder %s68, %s84
      %p86 = scmp.eq.s32.totalorder %s46, 0
      %p87 = por %p85, %p86
      %s88 = ssub.s32 %s47, %s59
      %p89 = scmp.eq.s32.totalorder %s88, 0
      %s91 = sadd.s32 %s90, 1
      %s92 = scalar_select %p89, %s90, %s91
      %p95 = pneg %p89
      %p96 = scmp.eq.s32.totalorder %s40, 1
      %p97 = por %p95, %p96
      %p98 = scmp.ne.s32.totalorder %s90, %s93
      %p99 = scmp.eq.s32.totalorder %s40, 0
      %p100 = por %p98, %p99
      %p101 = scmp.ne.s32.totalorder %s90, %s93
      %p102 = scmp.eq.s32.totalorder %s45, 1
      %p103 = por %p101, %p102
      %p104 = scmp.ne.s32.totalorder %s93, %s94
      %p105 = scmp.eq.s32.totalorder %s45, 0
      %p106 = por %p104, %p105
      %p107 = scmp.ne.s32.totalorder %s93, %s94
      %p108 = scmp.eq.s32.totalorder %s46, 1
      %p109 = por %p107, %p108
      %p111 = scmp.ne.s32.totalorder %s94, %s110
      %p112 = scmp.eq.s32.totalorder %s46, 0
      %p113 = por %p111, %p112
      %s115 = sadd.s32 %s114, 1
      %p118 = scmp.eq.s32.totalorder %s40, 1
      %p119 = scmp.ne.s32.totalorder %s114, %s116
      %p120 = scmp.eq.s32.totalorder %s40, 0
      %p121 = por %p119, %p120
      %p122 = scmp.ne.s32.totalorder %s114, %s116
      %p123 = scmp.eq.s32.totalorder %s45, 1
      %p124 = por %p122, %p123
      %p125 = scmp.ne.s32.totalorder %s116, %s117
      %p126 = scmp.eq.s32.totalorder %s45, 0
      %p127 = por %p125, %p126
      %p128 = scmp.ne.s32.totalorder %s116, %s117
      %p129 = scmp.eq.s32.totalorder %s46, 1
      %p130 = por %p128, %p129
      %p132 = scmp.ne.s32.totalorder %s117, %s131
      %p133 = scmp.eq.s32.totalorder %s46, 0
      %p134 = por %p132, %p133
      %s136 = sadd.s32 %s135, 1
      %p139 = scmp.eq.s32.totalorder %s40, 1
      %p140 = scmp.ne.s32.totalorder %s135, %s137
      %p141 = scmp.eq.s32.totalorder %s40, 0
      %p142 = por %p140, %p141
      %p143 = scmp.ne.s32.totalorder %s135, %s137
      %p144 = scmp.eq.s32.totalorder %s45, 1
      %p145 = por %p143, %p144
      %p146 = scmp.ne.s32.totalorder %s137, %s138
      %p147 = scmp.eq.s32.totalorder %s45, 0
      %p148 = por %p146, %p147
      %p149 = scmp.ne.s32.totalorder %s137, %s138
      %p150 = scmp.eq.s32.totalorder %s46, 1
      %p151 = por %p149, %p150
      %p153 = scmp.ne.s32.totalorder %s138, %s152
      %p154 = scmp.eq.s32.totalorder %s46, 0
      %p155 = por %p153, %p154
      %s157 = sadd.s32 %s156, 1
      %p160 = scmp.eq.s32.totalorder %s40, 1
      %p161 = scmp.ne.s32.totalorder %s156, %s158
      %p162 = scmp.eq.s32.totalorder %s40, 0
      %p163 = por %p161, %p162
      %p164 = scmp.ne.s32.totalorder %s156, %s158
      %p165 = scmp.eq.s32.totalorder %s45, 1
      %p166 = por %p164, %p165
      %p167 = scmp.ne.s32.totalorder %s158, %s159
      %p168 = scmp.eq.s32.totalorder %s45, 0
      %p169 = por %p167, %p168
      %p170 = scmp.ne.s32.totalorder %s158, %s159
      %p171 = scmp.eq.s32.totalorder %s46, 1
      %p172 = por %p170, %p171
      %p174 = scmp.ne.s32.totalorder %s159, %s173
      %p175 = scmp.eq.s32.totalorder %s46, 0
      %p176 = por %p174, %p175
      %s178 = sadd.s32 %s177, 1
      %p181 = scmp.eq.s32.totalorder %s40, 1
      %p182 = scmp.ne.s32.totalorder %s177, %s179
      %p183 = scmp.eq.s32.totalorder %s40, 0
      %p184 = por %p182, %p183
      %p185 = scmp.ne.s32.totalorder %s177, %s179
      %p186 = scmp.eq.s32.totalorder %s45, 1
      %p187 = por %p185, %p186
      %p188 = scmp.ne.s32.totalorder %s179, %s180
      %p189 = scmp.eq.s32.totalorder %s45, 0
      %p190 = por %p188, %p189
      %p191 = scmp.ne.s32.totalorder %s179, %s180
      %p192 = scmp.eq.s32.totalorder %s46, 1
      %p193 = por %p191, %p192
      %p195 = scmp.ne.s32.totalorder %s180, %s194
      %p196 = scmp.eq.s32.totalorder %s46, 0
      %p197 = por %p195, %p196
      %s199 = sadd.s32 %s198, 1
      %p202 = scmp.eq.s32.totalorder %s40, 1
      %p203 = scmp.ne.s32.totalorder %s198, %s200
      %p204 = scmp.eq.s32.totalorder %s40, 0
      %p205 = por %p203, %p204
      %p206 = scmp.ne.s32.totalorder %s198, %s200
      %p207 = scmp.eq.s32.totalorder %s45, 1
      %p208 = por %p206, %p207
      %p209 = scmp.ne.s32.totalorder %s200, %s201
      %p210 = scmp.eq.s32.totalorder %s45, 0
      %p211 = por %p209, %p210
      %p212 = scmp.ne.s32.totalorder %s200, %s201
      %p213 = scmp.eq.s32.totalorder %s46, 1
      %p214 = por %p212, %p213
      %p216 = scmp.ne.s32.totalorder %s201, %s215
      %p217 = scmp.eq.s32.totalorder %s46, 0
      %p218 = por %p216, %p217
      %s220 = sadd.s32 %s219, 1
      %p223 = scmp.eq.s32.totalorder %s40, 1
      %p224 = scmp.ne.s32.totalorder %s219, %s221
      %p225 = scmp.eq.s32.totalorder %s40, 0
      %p226 = por %p224, %p225
      %p227 = scmp.ne.s32.totalorder %s219, %s221
      %p228 = scmp.eq.s32.totalorder %s45, 1
      %p229 = por %p227, %p228
      %p230 = scmp.ne.s32.totalorder %s221, %s222
      %p231 = scmp.eq.s32.totalorder %s45, 0
      %p232 = por %p230, %p231
      %p233 = scmp.ne.s32.totalorder %s221, %s222
      %p234 = scmp.eq.s32.totalorder %s46, 1
      %p235 = por %p233, %p234
      %p237 = scmp.ne.s32.totalorder %s222, %s236
      %p238 = scmp.eq.s32.totalorder %s46, 0
      %p239 = por %p237, %p238
      %s241 = sadd.s32 %s240, 1
      %p244 = scmp.eq.s32.totalorder %s40, 1
      %p245 = scmp.ne.s32.totalorder %s240, %s242
      %p246 = scmp.eq.s32.totalorder %s40, 0
      %p247 = por %p245, %p246
      %p248 = scmp.ne.s32.totalorder %s240, %s242
      %p249 = scmp.eq.s32.totalorder %s45, 1
      %p250 = por %p248, %p249
      %p251 = scmp.ne.s32.totalorder %s242, %s243
      %p252 = scmp.eq.s32.totalorder %s45, 0
      %p253 = por %p251, %p252
      %p254 = scmp.ne.s32.totalorder %s242, %s243
      %p255 = scmp.eq.s32.totalorder %s46, 1
      %p256 = por %p254, %p255
      %p258 = scmp.ne.s32.totalorder %s243, %s257
      %p259 = scmp.eq.s32.totalorder %s46, 0
      %p260 = por %p258, %p259
      %s262 = sadd.s32 %s261, 1
      %p265 = scmp.eq.s32.totalorder %s40, 1
      %p266 = scmp.ne.s32.totalorder %s261, %s263
      %p267 = scmp.eq.s32.totalorder %s40, 0
      %p268 = por %p266, %p267
      %p269 = scmp.ne.s32.totalorder %s261, %s263
      %p270 = scmp.eq.s32.totalorder %s45, 1
      %p271 = por %p269, %p270
      %p272 = scmp.ne.s32.totalorder %s263, %s264
      %p273 = scmp.eq.s32.totalorder %s45, 0
      %p274 = por %p272, %p273
      %p275 = scmp.ne.s32.totalorder %s263, %s264
      %p276 = scmp.eq.s32.totalorder %s46, 1
      %p277 = por %p275, %p276
      %p279 = scmp.ne.s32.totalorder %s264, %s278
      %p280 = scmp.eq.s32.totalorder %s46, 0
      %p281 = por %p279, %p280
      %s283 = sadd.s32 %s282, 1
      %p286 = scmp.eq.s32.totalorder %s40, 1
      %p287 = scmp.ne.s32.totalorder %s282, %s284
      %p288 = scmp.eq.s32.totalorder %s40, 0
      %p289 = por %p287, %p288
      %p290 = scmp.ne.s32.totalorder %s282, %s284
      %p291 = scmp.eq.s32.totalorder %s45, 1
      %p292 = por %p290, %p291
      %p293 = scmp.ne.s32.totalorder %s284, %s285
      %p294 = scmp.eq.s32.totalorder %s45, 0
      %p295 = por %p293, %p294
      %p296 = scmp.ne.s32.totalorder %s284, %s285
      %p297 = scmp.eq.s32.totalorder %s46, 1
      %p298 = por %p296, %p297
      %p300 = scmp.ne.s32.totalorder %s285, %s299
      %p301 = scmp.eq.s32.totalorder %s46, 0
      %p302 = por %p300, %p301
      %s304 = sadd.s32 %s303, 1
      %p307 = scmp.eq.s32.totalorder %s40, 1
      %p308 = scmp.ne.s32.totalorder %s303, %s305
      %p309 = scmp.eq.s32.totalorder %s40, 0
      %p310 = por %p308, %p309
      %p311 = scmp.ne.s32.totalorder %s303, %s305
      %p312 = scmp.eq.s32.totalorder %s45, 1
      %p313 = por %p311, %p312
      %p314 = scmp.ne.s32.totalorder %s305, %s306
      %p315 = scmp.eq.s32.totalorder %s45, 0
      %p316 = por %p314, %p315
      %p317 = scmp.ne.s32.totalorder %s305, %s306
      %p318 = scmp.eq.s32.totalorder %s46, 1
      %p319 = por %p317, %p318
      %p321 = scmp.ne.s32.totalorder %s306, %s320
      %p322 = scmp.eq.s32.totalorder %s46, 0
      %p323 = por %p321, %p322
      %s325 = sadd.s32 %s324, 1
      %p328 = scmp.eq.s32.totalorder %s40, 1
      %p329 = scmp.ne.s32.totalorder %s324, %s326
      %p330 = scmp.eq.s32.totalorder %s40, 0
      %p331 = por %p329, %p330
      %p332 = scmp.ne.s32.totalorder %s324, %s326
      %p333 = scmp.eq.s32.totalorder %s45, 1
      %p334 = por %p332, %p333
      %p335 = scmp.ne.s32.totalorder %s326, %s327
      %p336 = scmp.eq.s32.totalorder %s45, 0
      %p337 = por %p335, %p336
      %p338 = scmp.ne.s32.totalorder %s326, %s327
      %p339 = scmp.eq.s32.totalorder %s46, 1
      %p340 = por %p338, %p339
      %p342 = scmp.ne.s32.totalorder %s327, %s341
      %p343 = scmp.eq.s32.totalorder %s46, 0
      %p344 = por %p342, %p343
      %s346 = sadd.s32 %s345, 1
      %p349 = scmp.eq.s32.totalorder %s40, 1
      %p350 = scmp.ne.s32.totalorder %s345, %s347
      %p351 = scmp.eq.s32.totalorder %s40, 0
      %p352 = por %p350, %p351
      %p353 = scmp.ne.s32.totalorder %s345, %s347
      %p354 = scmp.eq.s32.totalorder %s45, 1
      %p355 = por %p353, %p354
      %p356 = scmp.ne.s32.totalorder %s347, %s348
      %p357 = scmp.eq.s32.totalorder %s45, 0
      %p358 = por %p356, %p357
      %p359 = scmp.ne.s32.totalorder %s347, %s348
      %p360 = scmp.eq.s32.totalorder %s46, 1
      %p361 = por %p359, %p360
      %p363 = scmp.ne.s32.totalorder %s348, %s362
      %p364 = scmp.eq.s32.totalorder %s46, 0
      %p365 = por %p363, %p364
      %s366 = ssub.s32 %s47, %s59
      %s367 = ssub.s32 %s48, %s55
      %s368 = sor.u32 %s366, %s367
      %p369 = scmp.eq.s32.totalorder %s368, 0
      %s371 = sadd.s32 %s370, 1
      %s372 = scalar_select %p369, %s370, %s371
      %p375 = pneg %p369
      %p376 = scmp.eq.s32.totalorder %s40, 1
      %p377 = por %p375, %p376
      %p378 = scmp.ne.s32.totalorder %s370, %s373
      %p379 = scmp.eq.s32.totalorder %s40, 0
      %p380 = por %p378, %p379
      %p381 = scmp.ne.s32.totalorder %s370, %s373
      %p382 = scmp.eq.s32.totalorder %s45, 1
      %p383 = por %p381, %p382
      %p384 = scmp.ne.s32.totalorder %s373, %s374
      %p385 = scmp.eq.s32.totalorder %s45, 0
      %p386 = por %p384, %p385
      %p387 = scmp.ne.s32.totalorder %s373, %s374
      %p388 = scmp.eq.s32.totalorder %s46, 1
      %p389 = por %p387, %p388
      %p391 = scmp.ne.s32.totalorder %s374, %s390
      %p392 = scmp.eq.s32.totalorder %s46, 0
      %p393 = por %p391, %p392
      %s394 = ssub.s32 %s47, %s59
      %s395 = ssub.s32 %s48, %s55
      %s396 = sor.u32 %s394, %s395
      %p397 = scmp.eq.s32.totalorder %s396, 0
      %s399 = sadd.s32 %s398, 1
      %s400 = scalar_select %p397, %s398, %s399
      %p403 = pneg %p397
      %p404 = scmp.eq.s32.totalorder %s40, 1
      %p405 = por %p403, %p404
      %p406 = scmp.ne.s32.totalorder %s398, %s401
      %p407 = scmp.eq.s32.totalorder %s40, 0
      %p408 = por %p406, %p407
      %p409 = scmp.ne.s32.totalorder %s398, %s401
      %p410 = scmp.eq.s32.totalorder %s45, 1
      %p411 = por %p409, %p410
      %p412 = scmp.ne.s32.totalorder %s401, %s402
      %p413 = scmp.eq.s32.totalorder %s45, 0
      %p414 = por %p412, %p413
      %p415 = scmp.ne.s32.totalorder %s401, %s402
      %p416 = scmp.eq.s32.totalorder %s46, 1
      %p417 = por %p415, %p416
      %p419 = scmp.ne.s32.totalorder %s402, %s418
      %p420 = scmp.eq.s32.totalorder %s46, 0
      %p421 = por %p419, %p420
      %p422 = scmp.le.s32.totalorder 1, %s40
      %p423 = scmp.lt.s32.totalorder %s40, 3
      %p424 = pnand %p422, %p423
      %p425 = pneg %p424
      // Predicated region
      $region9: #{bert_layer_pallas.1} parent=5 // pred_check
        _
      $region10: #{bert_layer_pallas.1} parent=5 // pred_check_branch
        %427 = sbr.rel (%p424) target = $region12
      $region11: #{bert_layer_pallas.1} parent=5 // pred_region
        %s428 = ssub.s32 %s40, 1
        // Predicated region
        $region13: #{bert_layer_pallas.1} parent=11 // pred_check
          %p429 = pneg %p127
        $region14: #{bert_layer_pallas.1} parent=11 // pred_check_branch
          %431 = sbr.rel (%p429) target = $region16
        $region15: #{bert_layer_pallas.1} parent=11 // pred_region
          %s433 = ssub.s32 256, 256
          %434 = vsyncadd [#allocation6], %s433
          %s435 = sshll.u32 [#allocation7], 4
          %s436 = int_to_ptr.vmem [resolvable:$true] %s435
          %441 = dma.hbm_to_vmem [thread:$0]  %s2, 256, %s436, [#allocation6], 64, 64, 4
        $region16: #{bert_layer_pallas.1} parent=11 // pred_fallthru
          _
        // Predicated region
        $region17: #{bert_layer_pallas.1} parent=11 // pred_check
          %p442 = pneg %p148
        $region18: #{bert_layer_pallas.1} parent=11 // pred_check_branch
          %444 = sbr.rel (%p442) target = $region20
        $region19: #{bert_layer_pallas.1} parent=11 // pred_region
          %s446 = ssub.s32 16, 16
          %447 = vsyncadd [#allocation9], %s446
          %s449 = sshll.u32 [#allocation8], 4
          %s450 = int_to_ptr.vmem [resolvable:$true] %s449
          %452 = dma.hbm_to_vmem [thread:$0]  %s3, 16, %s450, [#allocation9]
        $region20: #{bert_layer_pallas.1} parent=11 // pred_fallthru
          _
        // Predicated region
        $region21: #{bert_layer_pallas.1} parent=11 // pred_check
          %p453 = pneg %p169
        $region22: #{bert_layer_pallas.1} parent=11 // pred_check_branch
          %455 = sbr.rel (%p453) target = $region24
        $region23: #{bert_layer_pallas.1} parent=11 // pred_region
          %s457 = ssub.s32 256, 256
          %458 = vsyncadd [#allocation9], %s457
          %s459 = sshll.u32 [#allocation10], 4
          %s460 = int_to_ptr.vmem [resolvable:$true] %s459
          %465 = dma.hbm_to_vmem [thread:$0]  %s4, 256, %s460, [#allocation9], 64, 64, 4
        $region24: #{bert_layer_pallas.1} parent=11 // pred_fallthru
          _
        // Predicated region
        $region25: #{bert_layer_pallas.1} parent=11 // pred_check
          %p466 = pneg %p190
        $region26: #{bert_layer_pallas.1} parent=11 // pred_check_branch
          %468 = sbr.rel (%p466) target = $region28
        $region27: #{bert_layer_pallas.1} parent=11 // pred_region
          %s470 = ssub.s32 16, 16
          %471 = vsyncadd [#allocation12], %s470
          %s473 = sshll.u32 [#allocation11], 4
          %s474 = int_to_ptr.vmem [resolvable:$true] %s473
          %476 = dma.hbm_to_vmem [thread:$0]  %s5, 16, %s474, [#allocation12]
        $region28: #{bert_layer_pallas.1} parent=11 // pred_fallthru
          _
        // Predicated region
        $region29: #{bert_layer_pallas.1} parent=11 // pred_check
          %p477 = pneg %p211
        $region30: #{bert_layer_pallas.1} parent=11 // pred_check_branch
          %479 = sbr.rel (%p477) target = $region32
        $region31: #{bert_layer_pallas.1} parent=11 // pred_region
          %s481 = ssub.s32 16, 16
          %482 = vsyncadd [#allocation12], %s481
          %s484 = sshll.u32 [#allocation13], 4
          %s485 = int_to_ptr.vmem [resolvable:$true] %s484
          %487 = dma.hbm_to_vmem [thread:$0]  %s6, 16, %s485, [#allocation12]
        $region32: #{bert_layer_pallas.1} parent=11 // pred_fallthru
          _
        // Predicated region
        $region33: #{bert_layer_pallas.1} parent=11 // pred_check
          %p488 = pneg %p232
        $region34: #{bert_layer_pallas.1} parent=11 // pred_check_branch
          %490 = sbr.rel (%p488) target = $region36
        $region35: #{bert_layer_pallas.1} parent=11 // pred_region
          %s492 = ssub.s32 16, 16
          %493 = vsyncadd [#allocation15], %s492
          %s495 = sshll.u32 [#allocation14], 4
          %s496 = int_to_ptr.vmem [resolvable:$true] %s495
          %498 = dma.hbm_to_vmem [thread:$0]  %s7, 16, %s496, [#allocation15]
        $region36: #{bert_layer_pallas.1} parent=11 // pred_fallthru
          _
        // Predicated region
        $region37: #{bert_layer_pallas.1} parent=11 // pred_check
          %p499 = pneg %p253
        $region38: #{bert_layer_pallas.1} parent=11 // pred_check_branch
          %501 = sbr.rel (%p499) target = $region40
        $region39: #{bert_layer_pallas.1} parent=11 // pred_region
          %s503 = ssub.s32 256, 256
          %504 = vsyncadd [#allocation15], %s503
          %s505 = sshll.u32 [#allocation16], 4
          %s506 = int_to_ptr.vmem [resolvable:$true] %s505
          %511 = dma.hbm_to_vmem [thread:$0]  %s8, 256, %s506, [#allocation15], 64, 64, 4
        $region40: #{bert_layer_pallas.1} parent=11 // pred_fallthru
          _
        // Predicated region
        $region41: #{bert_layer_pallas.1} parent=11 // pred_check
          %p512 = pneg %p274
        $region42: #{bert_layer_pallas.1} parent=11 // pred_check_branch
          %514 = sbr.rel (%p512) target = $region44
        $region43: #{bert_layer_pallas.1} parent=11 // pred_region
          %s516 = ssub.s32 16, 16
          %517 = vsyncadd [#allocation18], %s516
          %s519 = sshll.u32 [#allocation17], 4
          %s520 = int_to_ptr.vmem [resolvable:$true] %s519
          %522 = dma.hbm_to_vmem [thread:$0]  %s9, 16, %s520, [#allocation18]
        $region44: #{bert_layer_pallas.1} parent=11 // pred_fallthru
          _
        // Predicated region
        $region45: #{bert_layer_pallas.1} parent=11 // pred_check
          %p523 = pneg %p295
        $region46: #{bert_layer_pallas.1} parent=11 // pred_check_branch
          %525 = sbr.rel (%p523) target = $region48
        $region47: #{bert_layer_pallas.1} parent=11 // pred_region
          %s527 = ssub.s32 512, 512
          %528 = vsyncadd [#allocation18], %s527
          %s529 = sshll.u32 [#allocation19], 4
          %s530 = int_to_ptr.vmem [resolvable:$true] %s529
          %535 = dma.hbm_to_vmem [thread:$0]  %s10, 512, %s530, [#allocation18], 64, 64, 4
        $region48: #{bert_layer_pallas.1} parent=11 // pred_fallthru
          _
        // Predicated region
        $region49: #{bert_layer_pallas.1} parent=11 // pred_check
          %p536 = pneg %p316
        $region50: #{bert_layer_pallas.1} parent=11 // pred_check_branch
          %538 = sbr.rel (%p536) target = $region52
        $region51: #{bert_layer_pallas.1} parent=11 // pred_region
          %s540 = ssub.s32 16, 16
          %541 = vsyncadd [#allocation21], %s540
          %s543 = sshll.u32 [#allocation20], 4
          %s544 = int_to_ptr.vmem [resolvable:$true] %s543
          %546 = dma.hbm_to_vmem [thread:$0]  %s11, 16, %s544, [#allocation21]
        $region52: #{bert_layer_pallas.1} parent=11 // pred_fallthru
          _
        // Predicated region
        $region53: #{bert_layer_pallas.1} parent=11 // pred_check
          %p547 = pneg %p337
        $region54: #{bert_layer_pallas.1} parent=11 // pred_check_branch
          %549 = sbr.rel (%p547) target = $region56
        $region55: #{bert_layer_pallas.1} parent=11 // pred_region
          %s551 = ssub.s32 16, 16
          %552 = vsyncadd [#allocation21], %s551
          %s554 = sshll.u32 [#allocation22], 4
          %s555 = int_to_ptr.vmem [resolvable:$true] %s554
          %557 = dma.hbm_to_vmem [thread:$0]  %s12, 16, %s555, [#allocation21]
        $region56: #{bert_layer_pallas.1} parent=11 // pred_fallthru
          _
        // Predicated region
        $region57: #{bert_layer_pallas.1} parent=11 // pred_check
          %p558 = pneg %p358
        $region58: #{bert_layer_pallas.1} parent=11 // pred_check_branch
          %560 = sbr.rel (%p558) target = $region60
        $region59: #{bert_layer_pallas.1} parent=11 // pred_region
          %s562 = ssub.s32 16, 16
          %563 = vsyncadd [#allocation24], %s562
          %s565 = sshll.u32 [#allocation23], 4
          %s566 = int_to_ptr.vmem [resolvable:$true] %s565
          %568 = dma.hbm_to_vmem [thread:$0]  %s13, 16, %s566, [#allocation24]
        $region60: #{bert_layer_pallas.1} parent=11 // pred_fallthru
          _
      $region12: #{bert_layer_pallas.1} parent=5 // pred_fallthru
        _
      %p569 = scmp.lt.s32.totalorder %s40, 2
      // Predicated region
      $region61: #{bert_layer_pallas.1} parent=5 // pred_check
        %p570 = pneg %p569
      $region62: #{bert_layer_pallas.1} parent=5 // pred_check_branch
        %572 = sbr.rel (%p570) target = $region64
      $region63: #{bert_layer_pallas.1} parent=5 // pred_region
        // Predicated region
        $region65: #{bert_layer_pallas.1} parent=63 // pred_check
          %p573 = pneg %p74
        $region66: #{bert_layer_pallas.1} parent=63 // pred_check_branch
          %575 = sbr.rel (%p573) target = $region68
        $region67: #{bert_layer_pallas.1} parent=63 // pred_region
          %s576 = sand.u32 %s64, 1
          %s577 = scalar_lea.sflag [#allocation3], %s576
          %s578 = sand.u32 %s64, 1
          %s579 = smul.addr %s578, 8
          %s580 = scalar_lea.vmem [#allocation2], %s579
          %s582 = ssub.s32 128, 128
          %583 = vsyncadd %s577, %s582
          %s584 = sadd.s32 %s48, %s47
          %s585 = smul.addr %s584, 128
          %s586 = scalar_lea.hbm %s0, %s585
          %s588 = sshll.u32 %s580, 4
          %s589 = int_to_ptr.vmem [resolvable:$true] %s588
          %591 = dma.hbm_to_vmem [thread:$0]  %s586, 128, %s589, %s577
        $region68: #{bert_layer_pallas.1} parent=63 // pred_fallthru
          _
        // Predicated region
        $region69: #{bert_layer_pallas.1} parent=63 // pred_check
          %p592 = pneg %p100
        $region70: #{bert_layer_pallas.1} parent=63 // pred_check_branch
          %594 = sbr.rel (%p592) target = $region72
        $region71: #{bert_layer_pallas.1} parent=63 // pred_region
          %s595 = sand.u32 %s40, 1
          %s596 = scalar_lea.sflag [#allocation6], %s595
          %s597 = sand.u32 %s90, 1
          %s598 = scalar_lea.vmem [#allocation5], %s597
          %s600 = ssub.s32 16, 16
          %601 = vsyncadd %s596, %s600
          %s602 = smul.addr %s47, 16
          %s603 = scalar_lea.hbm %s1, %s602
          %s605 = sshll.u32 %s598, 4
          %s606 = int_to_ptr.vmem [resolvable:$true] %s605
          %608 = dma.hbm_to_vmem [thread:$0]  %s603, 16, %s606, %s596
        $region72: #{bert_layer_pallas.1} parent=63 // pred_fallthru
          _
      $region64: #{bert_layer_pallas.1} parent=5 // pred_fallthru
        _
      %p609 = scmp.le.s32.totalorder 1, %s40
      %p610 = scmp.lt.s32.totalorder %s40, 3
      %p611 = pnand %p609, %p610
      %p612 = pneg %p611
      // Predicated region
      $region73: #{bert_layer_pallas.1} parent=5 // pred_check
        _
      $region74: #{bert_layer_pallas.1} parent=5 // pred_check_branch
        %614 = sbr.rel (%p611) target = $region76
      $region75: #{bert_layer_pallas.1} parent=5 // pred_region
        %s615 = ssub.s32 %s40, 1
        %s616 = sand.u32 %s67, 1
        %s617 = scalar_lea.sflag [#allocation3], %s616
        %s618 = sand.u32 %s67, 1
        %s619 = smul.addr %s618, 8
        %s620 = scalar_lea.vmem [#allocation2], %s619
        // Predicated region
        $region77: #{bert_layer_pallas.1} parent=75 // pred_check
          %p621 = pneg %p80
        $region78: #{bert_layer_pallas.1} parent=75 // pred_check_branch
          %623 = sbr.rel (%p621) target = $region80
        $region79: #{bert_layer_pallas.1} parent=75 // pred_region
          %624 = dma.done %s617, 128
        $region80: #{bert_layer_pallas.1} parent=75 // pred_fallthru
          _
        %s625 = sand.u32 %s45, 1
        %s626 = scalar_lea.sflag [#allocation6], %s625
        %s627 = sand.u32 %s93, 1
        %s628 = scalar_lea.vmem [#allocation5], %s627
        // Predicated region
        $region81: #{bert_layer_pallas.1} parent=75 // pred_check
          %p629 = pneg %p106
        $region82: #{bert_layer_pallas.1} parent=75 // pred_check_branch
          %631 = sbr.rel (%p629) target = $region84
        $region83: #{bert_layer_pallas.1} parent=75 // pred_region
          %632 = dma.done %s626, 16
        $region84: #{bert_layer_pallas.1} parent=75 // pred_fallthru
          _
        // Predicated region
        $region85: #{bert_layer_pallas.1} parent=75 // pred_check
          %p633 = pneg %p127
        $region86: #{bert_layer_pallas.1} parent=75 // pred_check_branch
          %635 = sbr.rel (%p633) target = $region88
        $region87: #{bert_layer_pallas.1} parent=75 // pred_region
          %636 = dma.done [#allocation6], 256
        $region88: #{bert_layer_pallas.1} parent=75 // pred_fallthru
          _
        // Predicated region
        $region89: #{bert_layer_pallas.1} parent=75 // pred_check
          %p637 = pneg %p148
        $region90: #{bert_layer_pallas.1} parent=75 // pred_check_branch
          %639 = sbr.rel (%p637) target = $region92
        $region91: #{bert_layer_pallas.1} parent=75 // pred_region
          %640 = dma.done [#allocation9], 16
        $region92: #{bert_layer_pallas.1} parent=75 // pred_fallthru
          _
        // Predicated region
        $region93: #{bert_layer_pallas.1} parent=75 // pred_check
          %p641 = pneg %p169
        $region94: #{bert_layer_pallas.1} parent=75 // pred_check_branch
          %643 = sbr.rel (%p641) target = $region96
        $region95: #{bert_layer_pallas.1} parent=75 // pred_region
          %644 = dma.done [#allocation9], 256
        $region96: #{bert_layer_pallas.1} parent=75 // pred_fallthru
          _
        // Predicated region
        $region97: #{bert_layer_pallas.1} parent=75 // pred_check
          %p645 = pneg %p190
        $region98: #{bert_layer_pallas.1} parent=75 // pred_check_branch
          %647 = sbr.rel (%p645) target = $region100
        $region99: #{bert_layer_pallas.1} parent=75 // pred_region
          %648 = dma.done [#allocation12], 16
        $region100: #{bert_layer_pallas.1} parent=75 // pred_fallthru
          _
        // Predicated region
        $region101: #{bert_layer_pallas.1} parent=75 // pred_check
          %p649 = pneg %p211
        $region102: #{bert_layer_pallas.1} parent=75 // pred_check_branch
          %651 = sbr.rel (%p649) target = $region104
        $region103: #{bert_layer_pallas.1} parent=75 // pred_region
          %652 = dma.done [#allocation12], 16
        $region104: #{bert_layer_pallas.1} parent=75 // pred_fallthru
          _
        // Predicated region
        $region105: #{bert_layer_pallas.1} parent=75 // pred_check
          %p653 = pneg %p232
        $region106: #{bert_layer_pallas.1} parent=75 // pred_check_branch
          %655 = sbr.rel (%p653) target = $region108
        $region107: #{bert_layer_pallas.1} parent=75 // pred_region
          %656 = dma.done [#allocation15], 16
        $region108: #{bert_layer_pallas.1} parent=75 // pred_fallthru
          _
        // Predicated region
        $region109: #{bert_layer_pallas.1} parent=75 // pred_check
          %p657 = pneg %p253
        $region110: #{bert_layer_pallas.1} parent=75 // pred_check_branch
          %659 = sbr.rel (%p657) target = $region112
        $region111: #{bert_layer_pallas.1} parent=75 // pred_region
          %660 = dma.done [#allocation15], 256
        $region112: #{bert_layer_pallas.1} parent=75 // pred_fallthru
          _
        // Predicated region
        $region113: #{bert_layer_pallas.1} parent=75 // pred_check
          %p661 = pneg %p274
        $region114: #{bert_layer_pallas.1} parent=75 // pred_check_branch
          %663 = sbr.rel (%p661) target = $region116
        $region115: #{bert_layer_pallas.1} parent=75 // pred_region
          %664 = dma.done [#allocation18], 16
        $region116: #{bert_layer_pallas.1} parent=75 // pred_fallthru
          _
        // Predicated region
        $region117: #{bert_layer_pallas.1} parent=75 // pred_check
          %p665 = pneg %p295
        $region118: #{bert_layer_pallas.1} parent=75 // pred_check_branch
          %667 = sbr.rel (%p665) target = $region120
        $region119: #{bert_layer_pallas.1} parent=75 // pred_region
          %668 = dma.done [#allocation18], 512
        $region120: #{bert_layer_pallas.1} parent=75 // pred_fallthru
          _
        // Predicated region
        $region121: #{bert_layer_pallas.1} parent=75 // pred_check
          %p669 = pneg %p316
        $region122: #{bert_layer_pallas.1} parent=75 // pred_check_branch
          %671 = sbr.rel (%p669) target = $region124
        $region123: #{bert_layer_pallas.1} parent=75 // pred_region
          %672 = dma.done [#allocation21], 16
        $region124: #{bert_layer_pallas.1} parent=75 // pred_fallthru
          _
        // Predicated region
        $region125: #{bert_layer_pallas.1} parent=75 // pred_check
          %p673 = pneg %p337
        $region126: #{bert_layer_pallas.1} parent=75 // pred_check_branch
          %675 = sbr.rel (%p673) target = $region128
        $region127: #{bert_layer_pallas.1} parent=75 // pred_region
          %676 = dma.done [#allocation21], 16
        $region128: #{bert_layer_pallas.1} parent=75 // pred_fallthru
          _
        // Predicated region
        $region129: #{bert_layer_pallas.1} parent=75 // pred_check
          %p677 = pneg %p358
        $region130: #{bert_layer_pallas.1} parent=75 // pred_check_branch
          %679 = sbr.rel (%p677) target = $region132
        $region131: #{bert_layer_pallas.1} parent=75 // pred_region
          %680 = dma.done [#allocation24], 16
        $region132: #{bert_layer_pallas.1} parent=75 // pred_fallthru
          _
        %s681 = sand.u32 %s67, 1
        %s682 = scalar_lea.sflag [#allocation3], %s681
        %s683 = sand.u32 %s67, 1
        %s684 = smul.addr %s683, 8
        %s685 = scalar_lea.vmem [#allocation2], %s684
        %p686 = pneg %p80
        %p687 = pneg %p77
        %s688 = sand.u32 %s45, 1
        %s689 = scalar_lea.sflag [#allocation6], %s688
        %s690 = sand.u32 %s93, 1
        %s691 = scalar_lea.vmem [#allocation5], %s690
        %p692 = pneg %p106
        %p693 = pneg %p103
        %p694 = pneg %p127
        %p695 = pneg %p124
        %p696 = pneg %p148
        %p697 = pneg %p145
        %p698 = pneg %p169
        %p699 = pneg %p166
        %p700 = pneg %p190
        %p701 = pneg %p187
        %p702 = pneg %p211
        %p703 = pneg %p208
        %p704 = pneg %p232
        %p705 = pneg %p229
        %p706 = pneg %p253
        %p707 = pneg %p250
        %p708 = pneg %p274
        %p709 = pneg %p271
        %p710 = pneg %p295
        %p711 = pneg %p292
        %p712 = pneg %p316
        %p713 = pneg %p313
        %p714 = pneg %p337
        %p715 = pneg %p334
        %p716 = pneg %p358
        %p717 = pneg %p355
        %p718 = pneg %p386
        %p719 = pneg %p383
        %s720 = sand.u32 %s373, 1
        %s721 = scalar_lea.sflag [#allocation4], %s720
        %s722 = sand.u32 %s373, 1
        %s723 = smul.addr %s722, 8
        %s724 = scalar_lea.vmem [#allocation25], %s723
        %p725 = pneg %p414
        %p726 = pneg %p411
        %s727 = sand.u32 %s401, 1
        %s728 = scalar_lea.sflag [#allocation27], %s727
        %s729 = sand.u32 %s401, 1
        %s730 = smul.addr %s729, 32
        %s731 = scalar_lea.vmem [#allocation26], %s730
        %v733 = vld [vmem:[%s620] sm:$0xff]
        %v734 = vld [vmem:[%s628] sm:$0x1]
        %v735 = vpack.c.bf16 %v733, %v733
        %v736 = vld [vmem:[#allocation7] sm:$0xf]
        %v737 = vld [vmem:[#allocation7 + $0x4] sm:$0xf]
        %v738 = vld [vmem:[#allocation7 + $0x8] sm:$0xf]
        %v739 = vld [vmem:[#allocation7 + $0xc] sm:$0xf]
        %v740 = vld [vmem:[#allocation8] sm:$0x1]
        %v742 = vlaneseq
        %v743 = vshrl.u32 %v742, 7
        %v744 = vsub.s32 0, %v743
        %v745 = vrot.slane %v740, %v744
        %v751 = vunpack.c.l.b16 %v736
        %v752 = vunpack.c.l.b16 %v737
        %v753 = vunpack.c.l.b16 %v738
        %v754 = vunpack.c.l.b16 %v739
        %v755 = vpack.c.b16 %v752, %v751
        %v756 = vpack.c.b16 %v754, %v753
        %vm759 = vcmask 261120
        %v761 = vsel %vm759, %v735, 0
        %763 = vmatprep.subr.bf16.mxu0 0
        %764 = vmatpush1.bf16.msra.mxu0 %v755
        %765 = vmatprep.subr.bf16.mxu0 0
        %766 = vmatpush1.bf16.msra.mxu0 %v756
        %767 = vmatprep.subr.bf16.mxu0 0
        %768 = vmatpush1.bf16.msra.mxu0 0
        %769 = vmatprep.subr.bf16.mxu0 0
        %770 = vmatpush1.bf16.msra.mxu0 0
        %771 = vmatprep.subr.bf16.mxu0 0
        %772 = vmatpush1.bf16.msra.mxu0 0
        %773 = vmatprep.subr.bf16.mxu0 0
        %774 = vmatpush1.bf16.msra.mxu0 0
        %775 = vmatprep.subr.bf16.mxu0 0
        %776 = vmatpush1.bf16.msra.mxu0 0
        %777 = vmatprep.subr.bf16.mxu0 0
        %778 = vmatpush1.bf16.msra.mxu0 0
        %779 = vmatprep.subr.bf16.mxu0 0
        %780 = vmatpush1.bf16.msra.mxu0 0
        %781 = vmatprep.subr.bf16.mxu0 0
        %782 = vmatpush1.bf16.msra.mxu0 0
        %783 = vmatprep.subr.bf16.mxu0 0
        %784 = vmatpush1.bf16.msra.mxu0 0
        %785 = vmatprep.subr.bf16.mxu0 0
        %786 = vmatpush1.bf16.msra.mxu0 0
        %787 = vmatprep.subr.bf16.mxu0 0
        %788 = vmatpush1.bf16.msra.mxu0 0
        %789 = vmatprep.subr.bf16.mxu0 0
        %790 = vmatpush1.bf16.msra.mxu0 0
        %791 = vmatprep.subr.bf16.mxu0 0
        %792 = vmatpush1.bf16.msra.mxu0 0
        %793 = vmatprep.subr.bf16.mxu0 0
        %794 = vmatpush1.bf16.msra.mxu0 0
        %795 = vmatprep.mubr.bf16.mxu0 0
        %796 = vmatmul.mubr.bf16.gmra.mrb[0].mxu0 %v761
        %v797 = vpop.f32.mrb[0].mxu0
        %v798 = vadd.f32 %v745, %v797
        %v799 = vpop.f32.mrb[0].mxu0
        %v800 = vpop.f32.mrb[0].mxu0
        %v801 = vpop.f32.mrb[0].mxu0
        %802 = vdwg.mxu0
        %v803 = vpack.c.bf16 %v798, %v798
        %805 = vrot.lane.b32.xlu0 %v798, 120
        %v806 = vpop.permute.xlu0 %805
        %808 = vrot.lane.b32.xlu0 %v798, 112
        %v809 = vpop.permute.xlu0 %808
        %811 = vrot.lane.b32.xlu0 %v798, 104
        %v812 = vpop.permute.xlu0 %811
        %v814 = vcombine.low %v798, %v809
        %v815 = vcombine.high %v798, %v809
        %v817 = vunpack.c.l.s4 1983009808
        %v818 = vunpack.c.0.s8 %v817
        %v819 = vlaneseq
        %v820 = vshrl.u32 %v819, 7
        %v821 = vsub.s32 %v818, %v820
        %v822 = vrot.slane %v814, %v821
        %v824 = vunpack.c.l.s4 1983009808
        %v825 = vunpack.c.0.s8 %v824
        %v826 = vlaneseq
        %v827 = vshrl.u32 %v826, 7
        %v828 = vsub.s32 %v825, %v827
        %v829 = vrot.slane %v815, %v828
        %v830 = vcombine.low %v806, %v812
        %v831 = vcombine.high %v806, %v812
        %v833 = vunpack.c.l.s4 1983009808
        %v834 = vunpack.c.0.s8 %v833
        %v835 = vlaneseq
        %v836 = vshrl.u32 %v835, 7
        %v837 = vsub.s32 %v834, %v836
        %v838 = vrot.slane %v830, %v837
        %v840 = vunpack.c.l.s4 1983009808
        %v841 = vunpack.c.0.s8 %v840
        %v842 = vlaneseq
        %v843 = vshrl.u32 %v842, 7
        %v844 = vsub.s32 %v841, %v843
        %v845 = vrot.slane %v831, %v844
        %v846 = vcombine.low %v822, %v838
        %v847 = vcombine.high %v822, %v838
        %v849 = vunpack.c.l.s4 1934713408
        %v850 = vunpack.c.0.s8 %v849
        %v851 = vlaneseq
        %v852 = vshrl.u32 %v851, 7
        %v853 = vsub.s32 %v850, %v852
        %v854 = vrot.slane %v846, %v853
        %v856 = vunpack.c.l.s4 1934713408
        %v857 = vunpack.c.0.s8 %v856
        %v858 = vlaneseq
        %v859 = vshrl.u32 %v858, 7
        %v860 = vsub.s32 %v857, %v859
        %v861 = vrot.slane %v847, %v860
        %v862 = vcombine.low %v829, %v845
        %v863 = vcombine.high %v829, %v845
        %v865 = vunpack.c.l.s4 1934713408
        %v866 = vunpack.c.0.s8 %v865
        %v867 = vlaneseq
        %v868 = vshrl.u32 %v867, 7
        %v869 = vsub.s32 %v866, %v868
        %v870 = vrot.slane %v862, %v869
        %v872 = vunpack.c.l.s4 1934713408
        %v873 = vunpack.c.0.s8 %v872
        %v874 = vlaneseq
        %v875 = vshrl.u32 %v874, 7
        %v876 = vsub.s32 %v873, %v875
        %v877 = vrot.slane %v863, %v876
        %v878 = vcombine.high %v854, 0.0
        %v879 = vcombine.high %v861, 0.0
        %v880 = vcombine.high %v870, 0.0
        %v881 = vcombine.high %v877, 0.0
        %v882 = vcombine.low %v854, %v861
        %v884 = vunpack.c.l.s4 1983009808
        %v885 = vunpack.c.0.s8 %v884
        %v886 = vlaneseq
        %v887 = vshrl.u32 %v886, 7
        %v888 = vsub.s32 %v885, %v887
        %v889 = vrot.slane %v882, %v888
        %v890 = vcombine.low %v878, %v879
        %v892 = vunpack.c.l.s4 1983009808
        %v893 = vunpack.c.0.s8 %v892
        %v894 = vlaneseq
        %v895 = vshrl.u32 %v894, 7
        %v896 = vsub.s32 %v893, %v895
        %v897 = vrot.slane %v890, %v896
        %v898 = vcombine.low %v870, %v877
        %v900 = vunpack.c.l.s4 1983009808
        %v901 = vunpack.c.0.s8 %v900
        %v902 = vlaneseq
        %v903 = vshrl.u32 %v902, 7
        %v904 = vsub.s32 %v901, %v903
        %v905 = vrot.slane %v898, %v904
        %v906 = vcombine.low %v880, %v881
        %v908 = vunpack.c.l.s4 1983009808
        %v909 = vunpack.c.0.s8 %v908
        %v910 = vlaneseq
        %v911 = vshrl.u32 %v910, 7
        %v912 = vsub.s32 %v909, %v911
        %v913 = vrot.slane %v906, %v912
        %v914 = vcombine.low %v889, %v897
        %v915 = vcombine.high %v889, %v897
        %v917 = vunpack.c.l.s4 1934713408
        %v918 = vunpack.c.0.s8 %v917
        %v919 = vlaneseq
        %v920 = vshrl.u32 %v919, 7
        %v921 = vsub.s32 %v918, %v920
        %v922 = vrot.slane %v914, %v921
        %v924 = vunpack.c.l.s4 1934713408
        %v925 = vunpack.c.0.s8 %v924
        %v926 = vlaneseq
        %v927 = vshrl.u32 %v926, 7
        %v928 = vsub.s32 %v925, %v927
        %v929 = vrot.slane %v915, %v928
        %v930 = vcombine.low %v905, %v913
        %v931 = vcombine.high %v905, %v913
        %v933 = vunpack.c.l.s4 1934713408
        %v934 = vunpack.c.0.s8 %v933
        %v935 = vlaneseq
        %v936 = vshrl.u32 %v935, 7
        %v937 = vsub.s32 %v934, %v936
        %v938 = vrot.slane %v930, %v937
        %v940 = vunpack.c.l.s4 1934713408
        %v941 = vunpack.c.0.s8 %v940
        %v942 = vlaneseq
        %v943 = vshrl.u32 %v942, 7
        %v944 = vsub.s32 %v941, %v943
        %v945 = vrot.slane %v931, %v944
        %v946 = vcombine.low %v922, %v938
        %v947 = vcombine.high %v922, %v938
        %v948 = vcombine.low %v929, %v945
        %v949 = vcombine.high %v929, %v945
        %v950 = vpack.c.bf16 %v946, %v946
        %v951 = vpack.c.bf16 %v947, %v947
        %v952 = vpack.c.bf16 %v948, %v948
        %v953 = vpack.c.bf16 %v949, %v949
        %955 = vrot.lane.b32.xlu0 %v803, 120
        %v956 = vpop.permute.xlu0 %955
        %957 = vrot.lane.b32.xlu0 %v803, 112
        %v958 = vpop.permute.xlu0 %957
        %959 = vrot.lane.b32.xlu0 %v803, 104
        %v960 = vpop.permute.xlu0 %959
        %961 = vrot.lane.b32.xlu0 %v803, 96
        %v962 = vpop.permute.xlu0 %961
        %963 = vrot.lane.b32.xlu0 %v956, 96
        %v964 = vpop.permute.xlu0 %963
        %965 = vrot.lane.b32.xlu0 %v958, 96
        %v966 = vpop.permute.xlu0 %965
        %967 = vrot.lane.b32.xlu0 %v960, 96
        %v968 = vpop.permute.xlu0 %967
        %v971 = vunpack.c.l.s4 1983009808
        %v972 = vunpack.c.0.s8 %v971
        %v973 = vlaneseq
        %v974 = vshrl.u32 %v973, 7
        %v975 = vsub.s32 %v972, %v974
        %v976 = vrot.slane %v962, %v975
        %v979 = vunpack.c.l.s4 1983009808
        %v980 = vunpack.c.0.s8 %v979
        %v981 = vlaneseq
        %v982 = vshrl.u32 %v981, 7
        %v983 = vsub.s32 %v980, %v982
        %v984 = vrot.slane %v966, %v983
        %v985 = vcombine.low %v976, %v984
        %v986 = vcombine.high %v976, %v984
        %v988 = vunpack.c.l.s4 1934713408
        %v989 = vunpack.c.0.s8 %v988
        %v990 = vlaneseq
        %v991 = vshrl.u32 %v990, 7
        %v992 = vsub.s32 %v989, %v991
        %v993 = vrot.slane %v985, %v992
        %v995 = vunpack.c.l.s4 1934713408
        %v996 = vunpack.c.0.s8 %v995
        %v997 = vlaneseq
        %v998 = vshrl.u32 %v997, 7
        %v999 = vsub.s32 %v996, %v998
        %v1000 = vrot.slane %v986, %v999
        %v1001 = vcombine.high %v993, 0
        %v1002 = vcombine.high %v1000, 0
        %v1005 = vunpack.c.l.s4 1983009808
        %v1006 = vunpack.c.0.s8 %v1005
        %v1007 = vlaneseq
        %v1008 = vshrl.u32 %v1007, 7
        %v1009 = vsub.s32 %v1006, %v1008
        %v1010 = vrot.slane %v964, %v1009
        %v1013 = vunpack.c.l.s4 1983009808
        %v1014 = vunpack.c.0.s8 %v1013
        %v1015 = vlaneseq
        %v1016 = vshrl.u32 %v1015, 7
        %v1017 = vsub.s32 %v1014, %v1016
        %v1018 = vrot.slane %v968, %v1017
        %v1019 = vcombine.low %v1010, %v1018
        %v1020 = vcombine.high %v1010, %v1018
        %v1022 = vunpack.c.l.s4 1934713408
        %v1023 = vunpack.c.0.s8 %v1022
        %v1024 = vlaneseq
        %v1025 = vshrl.u32 %v1024, 7
        %v1026 = vsub.s32 %v1023, %v1025
        %v1027 = vrot.slane %v1019, %v1026
        %v1029 = vunpack.c.l.s4 1934713408
        %v1030 = vunpack.c.0.s8 %v1029
        %v1031 = vlaneseq
        %v1032 = vshrl.u32 %v1031, 7
        %v1033 = vsub.s32 %v1030, %v1032
        %v1034 = vrot.slane %v1020, %v1033
        %v1035 = vcombine.high %v1027, 0
        %v1036 = vcombine.high %v1034, 0
        %v1039 = vpack.i.b16 %v1027, %v993
        %v1041 = vshrl.u32 %v993, 16
        %v1042 = vshrl.u32 %v1027, 16
        %v1043 = vpack.i.b16 %v1042, %v1041
        %v1047 = vpack.i.b16 %v1035, %v1001
        %v1049 = vshrl.u32 %v1001, 16
        %v1050 = vshrl.u32 %v1035, 16
        %v1051 = vpack.i.b16 %v1050, %v1049
        %v1055 = vpack.i.b16 %v1034, %v1000
        %v1057 = vshrl.u32 %v1000, 16
        %v1058 = vshrl.u32 %v1034, 16
        %v1059 = vpack.i.b16 %v1058, %v1057
        %v1063 = vpack.i.b16 %v1036, %v1002
        %v1065 = vshrl.u32 %v1002, 16
        %v1066 = vshrl.u32 %v1036, 16
        %v1067 = vpack.i.b16 %v1066, %v1065
        %v1069 = vcombine.low %v1039, %v1055
        %v1071 = vunpack.c.l.s4 1983009808
        %v1072 = vunpack.c.0.s8 %v1071
        %v1073 = vlaneseq
        %v1074 = vshrl.u32 %v1073, 7
        %v1075 = vsub.s32 %v1072, %v1074
        %v1076 = vrot.slane %v1069, %v1075
        %v1077 = vcombine.low %v1047, %v1063
        %v1079 = vunpack.c.l.s4 1983009808
        %v1080 = vunpack.c.0.s8 %v1079
        %v1081 = vlaneseq
        %v1082 = vshrl.u32 %v1081, 7
        %v1083 = vsub.s32 %v1080, %v1082
        %v1084 = vrot.slane %v1077, %v1083
        %v1085 = vcombine.low %v1076, %v1084
        %v1087 = vunpack.c.l.s4 1934713408
        %v1088 = vunpack.c.0.s8 %v1087
        %v1089 = vlaneseq
        %v1090 = vshrl.u32 %v1089, 7
        %v1091 = vsub.s32 %v1088, %v1090
        %v1092 = vrot.slane %v1085, %v1091
        %v1093 = vcombine.high %v1092, 0
        %v1094 = vcombine.low %v1043, %v1059
        %v1096 = vunpack.c.l.s4 1983009808
        %v1097 = vunpack.c.0.s8 %v1096
        %v1098 = vlaneseq
        %v1099 = vshrl.u32 %v1098, 7
        %v1100 = vsub.s32 %v1097, %v1099
        %v1101 = vrot.slane %v1094, %v1100
        %v1102 = vcombine.low %v1051, %v1067
        %v1104 = vunpack.c.l.s4 1983009808
        %v1105 = vunpack.c.0.s8 %v1104
        %v1106 = vlaneseq
        %v1107 = vshrl.u32 %v1106, 7
        %v1108 = vsub.s32 %v1105, %v1107
        %v1109 = vrot.slane %v1102, %v1108
        %v1110 = vcombine.low %v1101, %v1109
        %v1112 = vunpack.c.l.s4 1934713408
        %v1113 = vunpack.c.0.s8 %v1112
        %v1114 = vlaneseq
        %v1115 = vshrl.u32 %v1114, 7
        %v1116 = vsub.s32 %v1113, %v1115
        %v1117 = vrot.slane %v1110, %v1116
        %v1118 = vcombine.high %v1117, 0
        %v1121 = vpack.i.b16 %v1117, %v1092
        %v1122 = vshrl.u32 %v1092, 16
        %v1123 = vshrl.u32 %v1117, 16
        %v1124 = vpack.i.b16 %v1123, %v1122
        %v1127 = vpack.i.b16 %v1118, %v1093
        %v1128 = vshrl.u32 %v1093, 16
        %v1129 = vshrl.u32 %v1118, 16
        %v1130 = vpack.i.b16 %v1129, %v1128
        %1131 = vrot.lane.b32.xlu0 %v803, 64
        %v1132 = vpop.permute.xlu0 %1131
        %1133 = vrot.lane.b32.xlu0 %v956, 64
        %v1134 = vpop.permute.xlu0 %1133
        %1135 = vrot.lane.b32.xlu0 %v958, 64
        %v1136 = vpop.permute.xlu0 %1135
        %1137 = vrot.lane.b32.xlu0 %v960, 64
        %v1138 = vpop.permute.xlu0 %1137
        %v1141 = vunpack.c.l.s4 1983009808
        %v1142 = vunpack.c.0.s8 %v1141
        %v1143 = vlaneseq
        %v1144 = vshrl.u32 %v1143, 7
        %v1145 = vsub.s32 %v1142, %v1144
        %v1146 = vrot.slane %v1132, %v1145
        %v1149 = vunpack.c.l.s4 1983009808
        %v1150 = vunpack.c.0.s8 %v1149
        %v1151 = vlaneseq
        %v1152 = vshrl.u32 %v1151, 7
        %v1153 = vsub.s32 %v1150, %v1152
        %v1154 = vrot.slane %v1136, %v1153
        %v1155 = vcombine.low %v1146, %v1154
        %v1156 = vcombine.high %v1146, %v1154
        %v1158 = vunpack.c.l.s4 1934713408
        %v1159 = vunpack.c.0.s8 %v1158
        %v1160 = vlaneseq
        %v1161 = vshrl.u32 %v1160, 7
        %v1162 = vsub.s32 %v1159, %v1161
        %v1163 = vrot.slane %v1155, %v1162
        %v1165 = vunpack.c.l.s4 1934713408
        %v1166 = vunpack.c.0.s8 %v1165
        %v1167 = vlaneseq
        %v1168 = vshrl.u32 %v1167, 7
        %v1169 = vsub.s32 %v1166, %v1168
        %v1170 = vrot.slane %v1156, %v1169
        %v1171 = vcombine.high %v1163, 0
        %v1172 = vcombine.high %v1170, 0
        %v1175 = vunpack.c.l.s4 1983009808
        %v1176 = vunpack.c.0.s8 %v1175
        %v1177 = vlaneseq
        %v1178 = vshrl.u32 %v1177, 7
        %v1179 = vsub.s32 %v1176, %v1178
        %v1180 = vrot.slane %v1134, %v1179
        %v1183 = vunpack.c.l.s4 1983009808
        %v1184 = vunpack.c.0.s8 %v1183
        %v1185 = vlaneseq
        %v1186 = vshrl.u32 %v1185, 7
        %v1187 = vsub.s32 %v1184, %v1186
        %v1188 = vrot.slane %v1138, %v1187
        %v1189 = vcombine.low %v1180, %v1188
        %v1190 = vcombine.high %v1180, %v1188
        %v1192 = vunpack.c.l.s4 1934713408
        %v1193 = vunpack.c.0.s8 %v1192
        %v1194 = vlaneseq
        %v1195 = vshrl.u32 %v1194, 7
        %v1196 = vsub.s32 %v1193, %v1195
        %v1197 = vrot.slane %v1189, %v1196
        %v1199 = vunpack.c.l.s4 1934713408
        %v1200 = vunpack.c.0.s8 %v1199
        %v1201 = vlaneseq
        %v1202 = vshrl.u32 %v1201, 7
        %v1203 = vsub.s32 %v1200, %v1202
        %v1204 = vrot.slane %v1190, %v1203
        %v1205 = vcombine.high %v1197, 0
        %v1206 = vcombine.high %v1204, 0
        %v1209 = vpack.i.b16 %v1197, %v1163
        %v1211 = vshrl.u32 %v1163, 16
        %v1212 = vshrl.u32 %v1197, 16
        %v1213 = vpack.i.b16 %v1212, %v1211
        %v1217 = vpack.i.b16 %v1205, %v1171
        %v1219 = vshrl.u32 %v1171, 16
        %v1220 = vshrl.u32 %v1205, 16
        %v1221 = vpack.i.b16 %v1220, %v1219
        %v1225 = vpack.i.b16 %v1204, %v1170
        %v1227 = vshrl.u32 %v1170, 16
        %v1228 = vshrl.u32 %v1204, 16
        %v1229 = vpack.i.b16 %v1228, %v1227
        %v1233 = vpack.i.b16 %v1206, %v1172
        %v1235 = vshrl.u32 %v1172, 16
        %v1236 = vshrl.u32 %v1206, 16
        %v1237 = vpack.i.b16 %v1236, %v1235
        %v1239 = vcombine.low %v1209, %v1225
        %v1241 = vunpack.c.l.s4 1983009808
        %v1242 = vunpack.c.0.s8 %v1241
        %v1243 = vlaneseq
        %v1244 = vshrl.u32 %v1243, 7
        %v1245 = vsub.s32 %v1242, %v1244
        %v1246 = vrot.slane %v1239, %v1245
        %v1247 = vcombine.low %v1217, %v1233
        %v1249 = vunpack.c.l.s4 1983009808
        %v1250 = vunpack.c.0.s8 %v1249
        %v1251 = vlaneseq
        %v1252 = vshrl.u32 %v1251, 7
        %v1253 = vsub.s32 %v1250, %v1252
        %v1254 = vrot.slane %v1247, %v1253
        %v1255 = vcombine.low %v1246, %v1254
        %v1257 = vunpack.c.l.s4 1934713408
        %v1258 = vunpack.c.0.s8 %v1257
        %v1259 = vlaneseq
        %v1260 = vshrl.u32 %v1259, 7
        %v1261 = vsub.s32 %v1258, %v1260
        %v1262 = vrot.slane %v1255, %v1261
        %v1263 = vcombine.high %v1262, 0
        %v1264 = vcombine.low %v1213, %v1229
        %v1266 = vunpack.c.l.s4 1983009808
        %v1267 = vunpack.c.0.s8 %v1266
        %v1268 = vlaneseq
        %v1269 = vshrl.u32 %v1268, 7
        %v1270 = vsub.s32 %v1267, %v1269
        %v1271 = vrot.slane %v1264, %v1270
        %v1272 = vcombine.low %v1221, %v1237
        %v1274 = vunpack.c.l.s4 1983009808
        %v1275 = vunpack.c.0.s8 %v1274
        %v1276 = vlaneseq
        %v1277 = vshrl.u32 %v1276, 7
        %v1278 = vsub.s32 %v1275, %v1277
        %v1279 = vrot.slane %v1272, %v1278
        %v1280 = vcombine.low %v1271, %v1279
        %v1282 = vunpack.c.l.s4 1934713408
        %v1283 = vunpack.c.0.s8 %v1282
        %v1284 = vlaneseq
        %v1285 = vshrl.u32 %v1284, 7
        %v1286 = vsub.s32 %v1283, %v1285
        %v1287 = vrot.slane %v1280, %v1286
        %v1288 = vcombine.high %v1287, 0
        %v1291 = vpack.i.b16 %v1287, %v1262
        %v1292 = vshrl.u32 %v1262, 16
        %v1293 = vshrl.u32 %v1287, 16
        %v1294 = vpack.i.b16 %v1293, %v1292
        %v1297 = vpack.i.b16 %v1288, %v1263
        %v1298 = vshrl.u32 %v1263, 16
        %v1299 = vshrl.u32 %v1288, 16
        %v1300 = vpack.i.b16 %v1299, %v1298
        %v1302 = vlaneseq
        %v1303 = vshrl.u32 %v1302, 7
        %v1304 = vsub.s32 0, %v1303
        %v1305 = vrot.slane %v734, %v1304
        %vm1307 = vcmask 64512
        %v1309 = vsel %vm1307, %v950, 0
        %v1312 = vsel %vm1307, %v1121, 0
        %1314 = vmatprep.subr.bf16.mxu0 0
        %1315 = vmatpush1.bf16.xpose.msra.mxu0 %v1312
        %1316 = vmatprep.subr.bf16.mxu0 0
        %1317 = vmatpush1.bf16.xpose.msra.mxu0 0
        %1318 = vmatprep.subr.bf16.mxu0 0
        %1319 = vmatpush1.bf16.xpose.msra.mxu0 0
        %1320 = vmatprep.subr.bf16.mxu0 0
        %1321 = vmatpush1.bf16.xpose.msra.mxu0 0
        %1322 = vmatprep.subr.bf16.mxu0 0
        %1323 = vmatpush1.bf16.xpose.msra.mxu0 0
        %1324 = vmatprep.subr.bf16.mxu0 0
        %1325 = vmatpush1.bf16.xpose.msra.mxu0 0
        %1326 = vmatprep.subr.bf16.mxu0 0
        %1327 = vmatpush1.bf16.xpose.msra.mxu0 0
        %1328 = vmatprep.subr.bf16.mxu0 0
        %1329 = vmatpush1.bf16.xpose.msra.mxu0 0
        %1330 = vmatprep.subr.bf16.mxu0 0
        %1331 = vmatpush1.bf16.xpose.msra.mxu0 0
        %1332 = vmatprep.subr.bf16.mxu0 0
        %1333 = vmatpush1.bf16.xpose.msra.mxu0 0
        %1334 = vmatprep.subr.bf16.mxu0 0
        %1335 = vmatpush1.bf16.xpose.msra.mxu0 0
        %1336 = vmatprep.subr.bf16.mxu0 0
        %1337 = vmatpush1.bf16.xpose.msra.mxu0 0
        %1338 = vmatprep.subr.bf16.mxu0 0
        %1339 = vmatpush1.bf16.xpose.msra.mxu0 0
        %1340 = vmatprep.subr.bf16.mxu0 0
        %1341 = vmatpush1.bf16.xpose.msra.mxu0 0
        %1342 = vmatprep.subr.bf16.mxu0 0
        %1343 = vmatpush1.bf16.xpose.msra.mxu0 0
        %1344 = vmatprep.subr.bf16.mxu0 0
        %1345 = vmatpush1.bf16.xpose.msra.mxu0 0
        %1346 = vmatprep.mubr.bf16.mxu0 0
        %1347 = vmatmul.mubr.bf16.gmra.mrb[0].mxu0 %v1309
        %v1348 = vpop.f32.mrb[0].mxu0
        %v1349 = vadd.f32 %v1305, %v1348
        %v1350 = vpop.f32.mrb[0].mxu0
        %v1351 = vpop.f32.mrb[0].mxu0
        %v1352 = vpop.f32.mrb[0].mxu0
        %1353 = vdwg.mxu0
        %v1355 = vsel %vm1307, %v951, 0
        %v1358 = vsel %vm1307, %v1124, 0
        %1360 = vmatprep.subr.bf16.mxu0 0
        %1361 = vmatpush1.bf16.xpose.msra.mxu0 %v1358
        %1362 = vmatprep.subr.bf16.mxu0 0
        %1363 = vmatpush1.bf16.xpose.msra.mxu0 0
        %1364 = vmatprep.subr.bf16.mxu0 0
        %1365 = vmatpush1.bf16.xpose.msra.mxu0 0
        %1366 = vmatprep.subr.bf16.mxu0 0
        %1367 = vmatpush1.bf16.xpose.msra.mxu0 0
        %1368 = vmatprep.subr.bf16.mxu0 0
        %1369 = vmatpush1.bf16.xpose.msra.mxu0 0
        %1370 = vmatprep.subr.bf16.mxu0 0
        %1371 = vmatpush1.bf16.xpose.msra.mxu0 0
        %1372 = vmatprep.subr.bf16.mxu0 0
        %1373 = vmatpush1.bf16.xpose.msra.mxu0 0
        %1374 = vmatprep.subr.bf16.mxu0 0
        %1375 = vmatpush1.bf16.xpose.msra.mxu0 0
        %1376 = vmatprep.subr.bf16.mxu0 0
        %1377 = vmatpush1.bf16.xpose.msra.mxu0 0
        %1378 = vmatprep.subr.bf16.mxu0 0
        %1379 = vmatpush1.bf16.xpose.msra.mxu0 0
        %1380 = vmatprep.subr.bf16.mxu0 0
        %1381 = vmatpush1.bf16.xpose.msra.mxu0 0
        %1382 = vmatprep.subr.bf16.mxu0 0
        %1383 = vmatpush1.bf16.xpose.msra.mxu0 0
        %1384 = vmatprep.subr.bf16.mxu0 0
        %1385 = vmatpush1.bf16.xpose.msra.mxu0 0
        %1386 = vmatprep.subr.bf16.mxu0 0
        %1387 = vmatpush1.bf16.xpose.msra.mxu0 0
        %1388 = vmatprep.subr.bf16.mxu0 0
        %1389 = vmatpush1.bf16.xpose.msra.mxu0 0
        %1390 = vmatprep.subr.bf16.mxu0 0
        %1391 = vmatpush1.bf16.xpose.msra.mxu0 0
        %1392 = vmatprep.mubr.bf16.mxu0 0
        %1393 = vmatmul.mubr.bf16.gmra.mrb[0].mxu0 %v1355
        %v1394 = vpop.f32.mrb[0].mxu0
        %v1395 = vadd.f32 %v1305, %v1394
        %v1396 = vpop.f32.mrb[0].mxu0
        %v1397 = vpop.f32.mrb[0].mxu0
        %v1398 = vpop.f32.mrb[0].mxu0
        %1399 = vdwg.mxu0
        %v1401 = vsel %vm1307, %v952, 0
        %v1404 = vsel %vm1307, %v1127, 0
        %1406 = vmatprep.subr.bf16.mxu0 0
        %1407 = vmatpush1.bf16.xpose.msra.mxu0 %v1404
        %1408 = vmatprep.subr.bf16.mxu0 0
        %1409 = vmatpush1.bf16.xpose.msra.mxu0 0
        %1410 = vmatprep.subr.bf16.mxu0 0
        %1411 = vmatpush1.bf16.xpose.msra.mxu0 0
        %1412 = vmatprep.subr.bf16.mxu0 0
        %1413 = vmatpush1.bf16.xpose.msra.mxu0 0
        %1414 = vmatprep.subr.bf16.mxu0 0
        %1415 = vmatpush1.bf16.xpose.msra.mxu0 0
        %1416 = vmatprep.subr.bf16.mxu0 0
        %1417 = vmatpush1.bf16.xpose.msra.mxu0 0
        %1418 = vmatprep.subr.bf16.mxu0 0
        %1419 = vmatpush1.bf16.xpose.msra.mxu0 0
        %1420 = vmatprep.subr.bf16.mxu0 0
        %1421 = vmatpush1.bf16.xpose.msra.mxu0 0
        %1422 = vmatprep.subr.bf16.mxu0 0
        %1423 = vmatpush1.bf16.xpose.msra.mxu0 0
        %1424 = vmatprep.subr.bf16.mxu0 0
        %1425 = vmatpush1.bf16.xpose.msra.mxu0 0
        %1426 = vmatprep.subr.bf16.mxu0 0
        %1427 = vmatpush1.bf16.xpose.msra.mxu0 0
        %1428 = vmatprep.subr.bf16.mxu0 0
        %1429 = vmatpush1.bf16.xpose.msra.mxu0 0
        %1430 = vmatprep.subr.bf16.mxu0 0
        %1431 = vmatpush1.bf16.xpose.msra.mxu0 0
        %1432 = vmatprep.subr.bf16.mxu0 0
        %1433 = vmatpush1.bf16.xpose.msra.mxu0 0
        %1434 = vmatprep.subr.bf16.mxu0 0
        %1435 = vmatpush1.bf16.xpose.msra.mxu0 0
        %1436 = vmatprep.subr.bf16.mxu0 0
        %1437 = vmatpush1.bf16.xpose.msra.mxu0 0
        %1438 = vmatprep.mubr.bf16.mxu0 0
        %1439 = vmatmul.mubr.bf16.gmra.mrb[0].mxu0 %v1401
        %v1440 = vpop.f32.mrb[0].mxu0
        %v1441 = vadd.f32 %v1305, %v1440
        %v1442 = vpop.f32.mrb[0].mxu0
        %v1443 = vpop.f32.mrb[0].mxu0
        %v1444 = vpop.f32.mrb[0].mxu0
        %1445 = vdwg.mxu0
        %v1447 = vsel %vm1307, %v953, 0
        %v1450 = vsel %vm1307, %v1130, 0
        %1452 = vmatprep.subr.bf16.mxu0 0
        %1453 = vmatpush1.bf16.xpose.msra.mxu0 %v1450
        %1454 = vmatprep.subr.bf16.mxu0 0
        %1455 = vmatpush1.bf16.xpose.msra.mxu0 0
        %1456 = vmatprep.subr.bf16.mxu0 0
        %1457 = vmatpush1.bf16.xpose.msra.mxu0 0
        %1458 = vmatprep.subr.bf16.mxu0 0
        %1459 = vmatpush1.bf16.xpose.msra.mxu0 0
        %1460 = vmatprep.subr.bf16.mxu0 0
        %1461 = vmatpush1.bf16.xpose.msra.mxu0 0
        %1462 = vmatprep.subr.bf16.mxu0 0
        %1463 = vmatpush1.bf16.xpose.msra.mxu0 0
        %1464 = vmatprep.subr.bf16.mxu0 0
        %1465 = vmatpush1.bf16.xpose.msra.mxu0 0
        %1466 = vmatprep.subr.bf16.mxu0 0
        %1467 = vmatpush1.bf16.xpose.msra.mxu0 0
        %1468 = vmatprep.subr.bf16.mxu0 0
        %1469 = vmatpush1.bf16.xpose.msra.mxu0 0
        %1470 = vmatprep.subr.bf16.mxu0 0
        %1471 = vmatpush1.bf16.xpose.msra.mxu0 0
        %1472 = vmatprep.subr.bf16.mxu0 0
        %1473 = vmatpush1.bf16.xpose.msra.mxu0 0
        %1474 = vmatprep.subr.bf16.mxu0 0
        %1475 = vmatpush1.bf16.xpose.msra.mxu0 0
        %1476 = vmatprep.subr.bf16.mxu0 0
        %1477 = vmatpush1.bf16.xpose.msra.mxu0 0
        %1478 = vmatprep.subr.bf16.mxu0 0
        %1479 = vmatpush1.bf16.xpose.msra.mxu0 0
        %1480 = vmatprep.subr.bf16.mxu0 0
        %1481 = vmatpush1.bf16.xpose.msra.mxu0 0
        %1482 = vmatprep.subr.bf16.mxu0 0
        %1483 = vmatpush1.bf16.xpose.msra.mxu0 0
        %1484 = vmatprep.mubr.bf16.mxu0 0
        %1485 = vmatmul.mubr.bf16.gmra.mrb[0].mxu0 %v1447
        %v1486 = vpop.f32.mrb[0].mxu0
        %v1487 = vadd.f32 %v1305, %v1486
        %v1488 = vpop.f32.mrb[0].mxu0
        %v1489 = vpop.f32.mrb[0].mxu0
        %v1490 = vpop.f32.mrb[0].mxu0
        %1491 = vdwg.mxu0
        %v1492 = vsel %vm1307, %v1349, -inf
        %1493 = vmax.xlane.f32.xlu0 %v1492
        %v1494 = vpop.xlane.xlu0 %1493
        %v1495 = vsel %vm1307, %v1395, -inf
        %1496 = vmax.xlane.f32.xlu0 %v1495
        %v1497 = vpop.xlane.xlu0 %1496
        %v1498 = vsel %vm1307, %v1441, -inf
        %1499 = vmax.xlane.f32.xlu0 %v1498
        %v1500 = vpop.xlane.xlu0 %1499
        %v1501 = vsel %vm1307, %v1487, -inf
        %1502 = vmax.xlane.f32.xlu0 %v1501
        %v1503 = vpop.xlane.xlu0 %1502
        %v1504 = vsub.f32 %v1349, %v1494
        %v1505 = vsub.f32 %v1395, %v1497
        %v1506 = vsub.f32 %v1441, %v1500
        %v1507 = vsub.f32 %v1487, %v1503
        %v1508 = vmul.f32 %v1504, 1.442695
        %v1509 = vpow.pop %v1508
        %v1510 = vmul.f32 %v1505, 1.442695
        %v1511 = vpow.pop %v1510
        %v1512 = vmul.f32 %v1506, 1.442695
        %v1513 = vpow.pop %v1512
        %v1514 = vmul.f32 %v1507, 1.442695
        %v1515 = vpow.pop %v1514
        %v1516 = vsel %vm1307, %v1509, 0.0
        %1517 = vadd.xlane.f32.xlu0 %v1516
        %v1518 = vpop.xlane.xlu0 %1517
        %v1519 = vsel %vm1307, %v1511, 0.0
        %1520 = vadd.xlane.f32.xlu0 %v1519
        %v1521 = vpop.xlane.xlu0 %1520
        %v1522 = vsel %vm1307, %v1513, 0.0
        %1523 = vadd.xlane.f32.xlu0 %v1522
        %v1524 = vpop.xlane.xlu0 %1523
        %v1525 = vsel %vm1307, %v1515, 0.0
        %1526 = vadd.xlane.f32.xlu0 %v1525
        %v1527 = vpop.xlane.xlu0 %1526
        %v1528 = vrcp.pop %v1518
        %v1529 = vrcp.pop %v1521
        %v1530 = vrcp.pop %v1524
        %v1531 = vrcp.pop %v1527
        %v1532 = vmul.f32 %v1509, %v1528
        %v1533 = vmul.f32 %v1511, %v1529
        %v1534 = vmul.f32 %v1513, %v1530
        %v1535 = vmul.f32 %v1515, %v1531
        %1536 = vst.msk [vmem:[%s731] sm:$0xff] %vm1307, %v1532
        %1537 = vst.msk [vmem:[%s731 + $0x8] sm:$0xff] %vm1307, %v1533
        %1538 = vst.msk [vmem:[%s731 + $0x10] sm:$0xff] %vm1307, %v1534
        %1539 = vst.msk [vmem:[%s731 + $0x18] sm:$0xff] %vm1307, %v1535
        %v1540 = vpack.c.bf16 %v1532, %v1532
        %v1541 = vpack.c.bf16 %v1533, %v1533
        %v1542 = vpack.c.bf16 %v1534, %v1534
        %v1543 = vpack.c.bf16 %v1535, %v1535
        %v1545 = vsel %vm1307, %v1540, 0
        %vm1547 = vcmask 1043456
        %v1549 = vsel %vm1547, %v1291, 0
        %1551 = vmatprep.subr.bf16.mxu0 0
        %1552 = vmatpush1.bf16.msra.mxu0 %v1549
        %1553 = vmatprep.subr.bf16.mxu0 0
        %1554 = vmatpush1.bf16.msra.mxu0 0
        %1555 = vmatprep.subr.bf16.mxu0 0
        %1556 = vmatpush1.bf16.msra.mxu0 0
        %1557 = vmatprep.subr.bf16.mxu0 0
        %1558 = vmatpush1.bf16.msra.mxu0 0
        %1559 = vmatprep.subr.bf16.mxu0 0
        %1560 = vmatpush1.bf16.msra.mxu0 0
        %1561 = vmatprep.subr.bf16.mxu0 0
        %1562 = vmatpush1.bf16.msra.mxu0 0
        %1563 = vmatprep.subr.bf16.mxu0 0
        %1564 = vmatpush1.bf16.msra.mxu0 0
        %1565 = vmatprep.subr.bf16.mxu0 0
        %1566 = vmatpush1.bf16.msra.mxu0 0
        %1567 = vmatprep.subr.bf16.mxu0 0
        %1568 = vmatpush1.bf16.msra.mxu0 0
        %1569 = vmatprep.subr.bf16.mxu0 0
        %1570 = vmatpush1.bf16.msra.mxu0 0
        %1571 = vmatprep.subr.bf16.mxu0 0
        %1572 = vmatpush1.bf16.msra.mxu0 0
        %1573 = vmatprep.subr.bf16.mxu0 0
        %1574 = vmatpush1.bf16.msra.mxu0 0
        %1575 = vmatprep.subr.bf16.mxu0 0
        %1576 = vmatpush1.bf16.msra.mxu0 0
        %1577 = vmatprep.subr.bf16.mxu0 0
        %1578 = vmatpush1.bf16.msra.mxu0 0
        %1579 = vmatprep.subr.bf16.mxu0 0
        %1580 = vmatpush1.bf16.msra.mxu0 0
        %1581 = vmatprep.subr.bf16.mxu0 0
        %1582 = vmatpush1.bf16.msra.mxu0 0
        %1583 = vmatprep.mubr.bf16.mxu0 0
        %1584 = vmatmul.mubr.bf16.gmra.mrb[0].mxu0 %v1545
        %v1585 = vpop.f32.mrb[0].mxu0
        %v1586 = vadd.f32 0.0, %v1585
        %v1587 = vpop.f32.mrb[0].mxu0
        %v1588 = vpop.f32.mrb[0].mxu0
        %v1589 = vpop.f32.mrb[0].mxu0
        %1590 = vdwg.mxu0
        %v1592 = vsel %vm1307, %v1541, 0
        %v1595 = vsel %vm1547, %v1294, 0
        %1597 = vmatprep.subr.bf16.mxu0 0
        %1598 = vmatpush1.bf16.msra.mxu0 %v1595
        %1599 = vmatprep.subr.bf16.mxu0 0
        %1600 = vmatpush1.bf16.msra.mxu0 0
        %1601 = vmatprep.subr.bf16.mxu0 0
        %1602 = vmatpush1.bf16.msra.mxu0 0
        %1603 = vmatprep.subr.bf16.mxu0 0
        %1604 = vmatpush1.bf16.msra.mxu0 0
        %1605 = vmatprep.subr.bf16.mxu0 0
        %1606 = vmatpush1.bf16.msra.mxu0 0
        %1607 = vmatprep.subr.bf16.mxu0 0
        %1608 = vmatpush1.bf16.msra.mxu0 0
        %1609 = vmatprep.subr.bf16.mxu0 0
        %1610 = vmatpush1.bf16.msra.mxu0 0
        %1611 = vmatprep.subr.bf16.mxu0 0
        %1612 = vmatpush1.bf16.msra.mxu0 0
        %1613 = vmatprep.subr.bf16.mxu0 0
        %1614 = vmatpush1.bf16.msra.mxu0 0
        %1615 = vmatprep.subr.bf16.mxu0 0
        %1616 = vmatpush1.bf16.msra.mxu0 0
        %1617 = vmatprep.subr.bf16.mxu0 0
        %1618 = vmatpush1.bf16.msra.mxu0 0
        %1619 = vmatprep.subr.bf16.mxu0 0
        %1620 = vmatpush1.bf16.msra.mxu0 0
        %1621 = vmatprep.subr.bf16.mxu0 0
        %1622 = vmatpush1.bf16.msra.mxu0 0
        %1623 = vmatprep.subr.bf16.mxu0 0
        %1624 = vmatpush1.bf16.msra.mxu0 0
        %1625 = vmatprep.subr.bf16.mxu0 0
        %1626 = vmatpush1.bf16.msra.mxu0 0
        %1627 = vmatprep.subr.bf16.mxu0 0
        %1628 = vmatpush1.bf16.msra.mxu0 0
        %1629 = vmatprep.mubr.bf16.mxu0 0
        %1630 = vmatmul.mubr.bf16.gmra.mrb[0].mxu0 %v1592
        %v1631 = vpop.f32.mrb[0].mxu0
        %v1632 = vadd.f32 0.0, %v1631
        %v1633 = vpop.f32.mrb[0].mxu0
        %v1634 = vpop.f32.mrb[0].mxu0
        %v1635 = vpop.f32.mrb[0].mxu0
        %1636 = vdwg.mxu0
        %v1638 = vsel %vm1307, %v1542, 0
        %v1641 = vsel %vm1547, %v1297, 0
        %1643 = vmatprep.subr.bf16.mxu0 0
        %1644 = vmatpush1.bf16.msra.mxu0 %v1641
        %1645 = vmatprep.subr.bf16.mxu0 0
        %1646 = vmatpush1.bf16.msra.mxu0 0
        %1647 = vmatprep.subr.bf16.mxu0 0
        %1648 = vmatpush1.bf16.msra.mxu0 0
        %1649 = vmatprep.subr.bf16.mxu0 0
        %1650 = vmatpush1.bf16.msra.mxu0 0
        %1651 = vmatprep.subr.bf16.mxu0 0
        %1652 = vmatpush1.bf16.msra.mxu0 0
        %1653 = vmatprep.subr.bf16.mxu0 0
        %1654 = vmatpush1.bf16.msra.mxu0 0
        %1655 = vmatprep.subr.bf16.mxu0 0
        %1656 = vmatpush1.bf16.msra.mxu0 0
        %1657 = vmatprep.subr.bf16.mxu0 0
        %1658 = vmatpush1.bf16.msra.mxu0 0
        %1659 = vmatprep.subr.bf16.mxu0 0
        %1660 = vmatpush1.bf16.msra.mxu0 0
        %1661 = vmatprep.subr.bf16.mxu0 0
        %1662 = vmatpush1.bf16.msra.mxu0 0
        %1663 = vmatprep.subr.bf16.mxu0 0
        %1664 = vmatpush1.bf16.msra.mxu0 0
        %1665 = vmatprep.subr.bf16.mxu0 0
        %1666 = vmatpush1.bf16.msra.mxu0 0
        %1667 = vmatprep.subr.bf16.mxu0 0
        %1668 = vmatpush1.bf16.msra.mxu0 0
        %1669 = vmatprep.subr.bf16.mxu0 0
        %1670 = vmatpush1.bf16.msra.mxu0 0
        %1671 = vmatprep.subr.bf16.mxu0 0
        %1672 = vmatpush1.bf16.msra.mxu0 0
        %1673 = vmatprep.subr.bf16.mxu0 0
        %1674 = vmatpush1.bf16.msra.mxu0 0
        %1675 = vmatprep.mubr.bf16.mxu0 0
        %1676 = vmatmul.mubr.bf16.gmra.mrb[0].mxu0 %v1638
        %v1677 = vpop.f32.mrb[0].mxu0
        %v1678 = vadd.f32 0.0, %v1677
        %v1679 = vpop.f32.mrb[0].mxu0
        %v1680 = vpop.f32.mrb[0].mxu0
        %v1681 = vpop.f32.mrb[0].mxu0
        %1682 = vdwg.mxu0
        %v1684 = vsel %vm1307, %v1543, 0
        %v1687 = vsel %vm1547, %v1300, 0
        %1689 = vmatprep.subr.bf16.mxu0 0
        %1690 = vmatpush1.bf16.msra.mxu0 %v1687
        %1691 = vmatprep.subr.bf16.mxu0 0
        %1692 = vmatpush1.bf16.msra.mxu0 0
        %1693 = vmatprep.subr.bf16.mxu0 0
        %1694 = vmatpush1.bf16.msra.mxu0 0
        %1695 = vmatprep.subr.bf16.mxu0 0
        %1696 = vmatpush1.bf16.msra.mxu0 0
        %1697 = vmatprep.subr.bf16.mxu0 0
        %1698 = vmatpush1.bf16.msra.mxu0 0
        %1699 = vmatprep.subr.bf16.mxu0 0
        %1700 = vmatpush1.bf16.msra.mxu0 0
        %1701 = vmatprep.subr.bf16.mxu0 0
        %1702 = vmatpush1.bf16.msra.mxu0 0
        %1703 = vmatprep.subr.bf16.mxu0 0
        %1704 = vmatpush1.bf16.msra.mxu0 0
        %1705 = vmatprep.subr.bf16.mxu0 0
        %1706 = vmatpush1.bf16.msra.mxu0 0
        %1707 = vmatprep.subr.bf16.mxu0 0
        %1708 = vmatpush1.bf16.msra.mxu0 0
        %1709 = vmatprep.subr.bf16.mxu0 0
        %1710 = vmatpush1.bf16.msra.mxu0 0
        %1711 = vmatprep.subr.bf16.mxu0 0
        %1712 = vmatpush1.bf16.msra.mxu0 0
        %1713 = vmatprep.subr.bf16.mxu0 0
        %1714 = vmatpush1.bf16.msra.mxu0 0
        %1715 = vmatprep.subr.bf16.mxu0 0
        %1716 = vmatpush1.bf16.msra.mxu0 0
        %1717 = vmatprep.subr.bf16.mxu0 0
        %1718 = vmatpush1.bf16.msra.mxu0 0
        %1719 = vmatprep.subr.bf16.mxu0 0
        %1720 = vmatpush1.bf16.msra.mxu0 0
        %1721 = vmatprep.mubr.bf16.mxu0 0
        %1722 = vmatmul.mubr.bf16.gmra.mrb[0].mxu0 %v1684
        %v1723 = vpop.f32.mrb[0].mxu0
        %v1724 = vadd.f32 0.0, %v1723
        %v1725 = vpop.f32.mrb[0].mxu0
        %v1726 = vpop.f32.mrb[0].mxu0
        %v1727 = vpop.f32.mrb[0].mxu0
        %1728 = vdwg.mxu0
        %v1729 = vcombine.low %v1586, %v1678
        %v1730 = vcombine.high %v1586, %v1678
        %v1732 = vunpack.c.l.s4 1983009808
        %v1733 = vunpack.c.0.s8 %v1732
        %v1734 = vlaneseq
        %v1735 = vshrl.u32 %v1734, 7
        %v1736 = vsub.s32 %v1733, %v1735
        %v1737 = vrot.slane %v1729, %v1736
        %v1739 = vunpack.c.l.s4 1983009808
        %v1740 = vunpack.c.0.s8 %v1739
        %v1741 = vlaneseq
        %v1742 = vshrl.u32 %v1741, 7
        %v1743 = vsub.s32 %v1740, %v1742
        %v1744 = vrot.slane %v1730, %v1743
        %v1745 = vcombine.low %v1632, %v1724
        %v1746 = vcombine.high %v1632, %v1724
        %v1748 = vunpack.c.l.s4 1983009808
        %v1749 = vunpack.c.0.s8 %v1748
        %v1750 = vlaneseq
        %v1751 = vshrl.u32 %v1750, 7
        %v1752 = vsub.s32 %v1749, %v1751
        %v1753 = vrot.slane %v1745, %v1752
        %v1755 = vunpack.c.l.s4 1983009808
        %v1756 = vunpack.c.0.s8 %v1755
        %v1757 = vlaneseq
        %v1758 = vshrl.u32 %v1757, 7
        %v1759 = vsub.s32 %v1756, %v1758
        %v1760 = vrot.slane %v1746, %v1759
        %v1761 = vcombine.low %v1737, %v1753
        %v1762 = vcombine.high %v1737, %v1753
        %v1764 = vunpack.c.l.s4 1934713408
        %v1765 = vunpack.c.0.s8 %v1764
        %v1766 = vlaneseq
        %v1767 = vshrl.u32 %v1766, 7
        %v1768 = vsub.s32 %v1765, %v1767
        %v1769 = vrot.slane %v1761, %v1768
        %v1771 = vunpack.c.l.s4 1934713408
        %v1772 = vunpack.c.0.s8 %v1771
        %v1773 = vlaneseq
        %v1774 = vshrl.u32 %v1773, 7
        %v1775 = vsub.s32 %v1772, %v1774
        %v1776 = vrot.slane %v1762, %v1775
        %v1777 = vcombine.low %v1744, %v1760
        %v1778 = vcombine.high %v1744, %v1760
        %v1780 = vunpack.c.l.s4 1934713408
        %v1781 = vunpack.c.0.s8 %v1780
        %v1782 = vlaneseq
        %v1783 = vshrl.u32 %v1782, 7
        %v1784 = vsub.s32 %v1781, %v1783
        %v1785 = vrot.slane %v1777, %v1784
        %v1787 = vunpack.c.l.s4 1934713408
        %v1788 = vunpack.c.0.s8 %v1787
        %v1789 = vlaneseq
        %v1790 = vshrl.u32 %v1789, 7
        %v1791 = vsub.s32 %v1788, %v1790
        %v1792 = vrot.slane %v1778, %v1791
        %v1793 = vcombine.high %v1769, 0.0
        %v1794 = vcombine.high %v1776, 0.0
        %v1795 = vcombine.high %v1785, 0.0
        %v1796 = vcombine.high %v1792, 0.0
        %v1797 = vcombine.low %v1769, %v1776
        %v1799 = vunpack.c.l.s4 1983009808
        %v1800 = vunpack.c.0.s8 %v1799
        %v1801 = vlaneseq
        %v1802 = vshrl.u32 %v1801, 7
        %v1803 = vsub.s32 %v1800, %v1802
        %v1804 = vrot.slane %v1797, %v1803
        %v1805 = vcombine.low %v1793, %v1794
        %v1807 = vunpack.c.l.s4 1983009808
        %v1808 = vunpack.c.0.s8 %v1807
        %v1809 = vlaneseq
        %v1810 = vshrl.u32 %v1809, 7
        %v1811 = vsub.s32 %v1808, %v1810
        %v1812 = vrot.slane %v1805, %v1811
        %v1813 = vcombine.low %v1785, %v1792
        %v1815 = vunpack.c.l.s4 1983009808
        %v1816 = vunpack.c.0.s8 %v1815
        %v1817 = vlaneseq
        %v1818 = vshrl.u32 %v1817, 7
        %v1819 = vsub.s32 %v1816, %v1818
        %v1820 = vrot.slane %v1813, %v1819
        %v1821 = vcombine.low %v1795, %v1796
        %v1823 = vunpack.c.l.s4 1983009808
        %v1824 = vunpack.c.0.s8 %v1823
        %v1825 = vlaneseq
        %v1826 = vshrl.u32 %v1825, 7
        %v1827 = vsub.s32 %v1824, %v1826
        %v1828 = vrot.slane %v1821, %v1827
        %v1829 = vcombine.low %v1804, %v1812
        %v1830 = vcombine.high %v1804, %v1812
        %v1832 = vunpack.c.l.s4 1934713408
        %v1833 = vunpack.c.0.s8 %v1832
        %v1834 = vlaneseq
        %v1835 = vshrl.u32 %v1834, 7
        %v1836 = vsub.s32 %v1833, %v1835
        %v1837 = vrot.slane %v1829, %v1836
        %v1839 = vunpack.c.l.s4 1934713408
        %v1840 = vunpack.c.0.s8 %v1839
        %v1841 = vlaneseq
        %v1842 = vshrl.u32 %v1841, 7
        %v1843 = vsub.s32 %v1840, %v1842
        %v1844 = vrot.slane %v1830, %v1843
        %v1845 = vcombine.low %v1820, %v1828
        %v1846 = vcombine.high %v1820, %v1828
        %v1848 = vunpack.c.l.s4 1934713408
        %v1849 = vunpack.c.0.s8 %v1848
        %v1850 = vlaneseq
        %v1851 = vshrl.u32 %v1850, 7
        %v1852 = vsub.s32 %v1849, %v1851
        %v1853 = vrot.slane %v1845, %v1852
        %v1855 = vunpack.c.l.s4 1934713408
        %v1856 = vunpack.c.0.s8 %v1855
        %v1857 = vlaneseq
        %v1858 = vshrl.u32 %v1857, 7
        %v1859 = vsub.s32 %v1856, %v1858
        %v1860 = vrot.slane %v1846, %v1859
        %v1861 = vcombine.low %v1837, %v1853
        %v1862 = vcombine.high %v1837, %v1853
        %v1863 = vcombine.low %v1844, %v1860
        %v1864 = vcombine.high %v1844, %v1860
        %1866 = vrot.lane.b32.xlu0 %v1862, 8
        %v1867 = vpop.permute.xlu0 %1866
        %1870 = vrot.lane.b32.xlu0 %v1863, 16
        %v1871 = vpop.permute.xlu0 %1870
        %1874 = vrot.lane.b32.xlu0 %v1864, 24
        %v1875 = vpop.permute.xlu0 %1874
        %v1877 = vsel %vm1307, %v1861, %v1867
        %vm1878 = vcmask 130048
        %v1879 = vsel %vm1878, %v1877, %v1871
        %vm1880 = vcmask 195584
        %v1881 = vsel %vm1880, %v1879, %v1875
        %v1882 = vpack.c.bf16 %v1881, %v1881
        %v1883 = vld [vmem:[#allocation10] sm:$0xf]
        %v1884 = vld [vmem:[#allocation10 + $0x4] sm:$0xf]
        %v1885 = vld [vmem:[#allocation10 + $0x8] sm:$0xf]
        %v1886 = vld [vmem:[#allocation10 + $0xc] sm:$0xf]
        %v1887 = vld [vmem:[#allocation11] sm:$0x1]
        %v1889 = vlaneseq
        %v1890 = vshrl.u32 %v1889, 7
        %v1891 = vsub.s32 0, %v1890
        %v1892 = vrot.slane %v1887, %v1891
        %v1898 = vunpack.c.l.b16 %v1883
        %v1899 = vunpack.c.l.b16 %v1884
        %v1900 = vunpack.c.l.b16 %v1885
        %v1901 = vunpack.c.l.b16 %v1886
        %v1902 = vpack.c.b16 %v1899, %v1898
        %v1903 = vpack.c.b16 %v1901, %v1900
        %v1907 = vsel %vm759, %v1882, 0
        %1909 = vmatprep.subr.bf16.mxu0 0
        %1910 = vmatpush1.bf16.msra.mxu0 %v1902
        %1911 = vmatprep.subr.bf16.mxu0 0
        %1912 = vmatpush1.bf16.msra.mxu0 %v1903
        %1913 = vmatprep.subr.bf16.mxu0 0
        %1914 = vmatpush1.bf16.msra.mxu0 0
        %1915 = vmatprep.subr.bf16.mxu0 0
        %1916 = vmatpush1.bf16.msra.mxu0 0
        %1917 = vmatprep.subr.bf16.mxu0 0
        %1918 = vmatpush1.bf16.msra.mxu0 0
        %1919 = vmatprep.subr.bf16.mxu0 0
        %1920 = vmatpush1.bf16.msra.mxu0 0
        %1921 = vmatprep.subr.bf16.mxu0 0
        %1922 = vmatpush1.bf16.msra.mxu0 0
        %1923 = vmatprep.subr.bf16.mxu0 0
        %1924 = vmatpush1.bf16.msra.mxu0 0
        %1925 = vmatprep.subr.bf16.mxu0 0
        %1926 = vmatpush1.bf16.msra.mxu0 0
        %1927 = vmatprep.subr.bf16.mxu0 0
        %1928 = vmatpush1.bf16.msra.mxu0 0
        %1929 = vmatprep.subr.bf16.mxu0 0
        %1930 = vmatpush1.bf16.msra.mxu0 0
        %1931 = vmatprep.subr.bf16.mxu0 0
        %1932 = vmatpush1.bf16.msra.mxu0 0
        %1933 = vmatprep.subr.bf16.mxu0 0
        %1934 = vmatpush1.bf16.msra.mxu0 0
        %1935 = vmatprep.subr.bf16.mxu0 0
        %1936 = vmatpush1.bf16.msra.mxu0 0
        %1937 = vmatprep.subr.bf16.mxu0 0
        %1938 = vmatpush1.bf16.msra.mxu0 0
        %1939 = vmatprep.subr.bf16.mxu0 0
        %1940 = vmatpush1.bf16.msra.mxu0 0
        %1941 = vmatprep.mubr.bf16.mxu0 0
        %1942 = vmatmul.mubr.bf16.gmra.mrb[0].mxu0 %v1907
        %v1943 = vpop.f32.mrb[0].mxu0
        %v1944 = vadd.f32 %v1892, %v1943
        %v1945 = vpop.f32.mrb[0].mxu0
        %v1946 = vpop.f32.mrb[0].mxu0
        %v1947 = vpop.f32.mrb[0].mxu0
        %1948 = vdwg.mxu0
        %v1949 = vadd.f32 %v1944, %v733
        %v1950 = vld [vmem:[#allocation13] sm:$0x1]
        %v1951 = vld [vmem:[#allocation14] sm:$0x1]
        %v1952 = vsel %vm759, %v1949, 0.0
        %1953 = vadd.xlane.f32.xlu0 %v1952
        %v1954 = vpop.xlane.xlu0 %1953
        %v1955 = vrcp.pop 32.0
        %v1956 = vmul.f32 %v1954, %v1955
        %v1957 = vsub.f32 %v1949, %v1956
        %v1958 = vmul.f32 %v1957, %v1957
        %v1959 = vsel %vm759, %v1958, 0.0
        %1960 = vadd.xlane.f32.xlu0 %v1959
        %v1961 = vpop.xlane.xlu0 %1960
        %v1962 = vmul.f32 %v1961, %v1955
        %v1963 = vadd.f32 %v1962, 1e-12
        %v1964 = vrsqrt.pop %v1963
        %v1965 = vmul.f32 %v1957, %v1964
        %v1967 = vlaneseq
        %v1968 = vshrl.u32 %v1967, 7
        %v1969 = vsub.s32 0, %v1968
        %v1970 = vrot.slane %v1950, %v1969
        %v1972 = vmul.f32 %v1965, %v1970
        %v1974 = vlaneseq
        %v1975 = vshrl.u32 %v1974, 7
        %v1976 = vsub.s32 0, %v1975
        %v1977 = vrot.slane %v1951, %v1976
        %v1979 = vadd.f32 %v1972, %v1977
        %v1980 = vpack.c.bf16 %v1979, %v1979
        %v1981 = vld [vmem:[#allocation16] sm:$0xf]
        %v1982 = vld [vmem:[#allocation16 + $0x4] sm:$0xf]
        %v1983 = vld [vmem:[#allocation16 + $0x8] sm:$0xf]
        %v1984 = vld [vmem:[#allocation16 + $0xc] sm:$0xf]
        %v1985 = vld [vmem:[#allocation17] sm:$0x1]
        %v1987 = vlaneseq
        %v1988 = vshrl.u32 %v1987, 7
        %v1989 = vsub.s32 0, %v1988
        %v1990 = vrot.slane %v1985, %v1989
        %v1996 = vunpack.c.l.b16 %v1981
        %v1997 = vunpack.c.l.b16 %v1982
        %v1998 = vunpack.c.l.b16 %v1983
        %v1999 = vunpack.c.l.b16 %v1984
        %v2000 = vpack.c.b16 %v1997, %v1996
        %v2001 = vpack.c.b16 %v1999, %v1998
        %v2005 = vsel %vm759, %v1980, 0
        %2007 = vmatprep.subr.bf16.mxu0 0
        %2008 = vmatpush1.bf16.msra.mxu0 %v2000
        %2009 = vmatprep.subr.bf16.mxu0 0
        %2010 = vmatpush1.bf16.msra.mxu0 %v2001
        %2011 = vmatprep.subr.bf16.mxu0 0
        %2012 = vmatpush1.bf16.msra.mxu0 0
        %2013 = vmatprep.subr.bf16.mxu0 0
        %2014 = vmatpush1.bf16.msra.mxu0 0
        %2015 = vmatprep.subr.bf16.mxu0 0
        %2016 = vmatpush1.bf16.msra.mxu0 0
        %2017 = vmatprep.subr.bf16.mxu0 0
        %2018 = vmatpush1.bf16.msra.mxu0 0
        %2019 = vmatprep.subr.bf16.mxu0 0
        %2020 = vmatpush1.bf16.msra.mxu0 0
        %2021 = vmatprep.subr.bf16.mxu0 0
        %2022 = vmatpush1.bf16.msra.mxu0 0
        %2023 = vmatprep.subr.bf16.mxu0 0
        %2024 = vmatpush1.bf16.msra.mxu0 0
        %2025 = vmatprep.subr.bf16.mxu0 0
        %2026 = vmatpush1.bf16.msra.mxu0 0
        %2027 = vmatprep.subr.bf16.mxu0 0
        %2028 = vmatpush1.bf16.msra.mxu0 0
        %2029 = vmatprep.subr.bf16.mxu0 0
        %2030 = vmatpush1.bf16.msra.mxu0 0
        %2031 = vmatprep.subr.bf16.mxu0 0
        %2032 = vmatpush1.bf16.msra.mxu0 0
        %2033 = vmatprep.subr.bf16.mxu0 0
        %2034 = vmatpush1.bf16.msra.mxu0 0
        %2035 = vmatprep.subr.bf16.mxu0 0
        %2036 = vmatpush1.bf16.msra.mxu0 0
        %2037 = vmatprep.subr.bf16.mxu0 0
        %2038 = vmatpush1.bf16.msra.mxu0 0
        %2039 = vmatprep.mubr.bf16.mxu0 0
        %2040 = vmatmul.mubr.bf16.gmra.mrb[0].mxu0 %v2005
        %v2041 = vpop.f32.mrb[0].mxu0
        %v2042 = vadd.f32 %v1990, %v2041
        %v2043 = vpop.f32.mrb[0].mxu0
        %v2044 = vpop.f32.mrb[0].mxu0
        %v2045 = vpop.f32.mrb[0].mxu0
        %2046 = vdwg.mxu0
        %v2047 = vmul.f32 %v2042, 0.5
        %v2048 = vmul.f32 %v2042, 0.70710677
        %vm2049 = vcmp.ge.f32.partialorder %v2048, 0.0
        %v2050 = vsel %vm2049, 1.0, -1.0
        %v2051 = vand.u32 2147483647, %v2048
        %v2052 = vmul.f32 %v2051, 0.3275911
        %v2053 = vadd.f32 %v2052, 1.0
        %v2054 = vrcp.pop %v2053
        %v2055 = vmul.f32 1.0, %v2054
        %v2056 = vmul.f32 %v2055, 1.0614054
        %v2057 = vadd.f32 %v2056, -1.4531521
        %v2058 = vmul.f32 %v2057, %v2055
        %v2059 = vadd.f32 %v2058, 1.4214138
        %v2060 = vmul.f32 %v2059, %v2055
        %v2061 = vadd.f32 %v2060, -0.28449672
        %v2062 = vmul.f32 %v2061, %v2055
        %v2063 = vadd.f32 %v2062, 0.2548296
        %v2064 = vmul.f32 %v2063, %v2055
        %v2065 = vsub.f32 0.0, %v2051
        %v2066 = vmul.f32 %v2065, %v2051
        %v2067 = vmul.f32 %v2066, 1.442695
        %v2068 = vpow.pop %v2067
        %v2069 = vmul.f32 %v2064, %v2068
        %v2070 = vsub.f32 1.0, %v2069
        %v2071 = vmul.f32 %v2050, %v2070
        %v2072 = vadd.f32 %v2071, 1.0
        %v2073 = vmul.f32 %v2047, %v2072
        %v2074 = vpack.c.bf16 %v2073, %v2073
        %v2075 = vld [vmem:[#allocation19] sm:$0xf]
        %v2076 = vld [vmem:[#allocation19 + $0x4] sm:$0xf]
        %v2077 = vld [vmem:[#allocation19 + $0x8] sm:$0xf]
        %v2078 = vld [vmem:[#allocation19 + $0xc] sm:$0xf]
        %v2079 = vld [vmem:[#allocation19 + $0x10] sm:$0xf]
        %v2080 = vld [vmem:[#allocation19 + $0x14] sm:$0xf]
        %v2081 = vld [vmem:[#allocation19 + $0x18] sm:$0xf]
        %v2082 = vld [vmem:[#allocation19 + $0x1c] sm:$0xf]
        %v2083 = vld [vmem:[#allocation20] sm:$0x1]
        %v2085 = vlaneseq
        %v2086 = vshrl.u32 %v2085, 7
        %v2087 = vsub.s32 0, %v2086
        %v2088 = vrot.slane %v2083, %v2087
        %v2098 = vunpack.c.l.b16 %v2075
        %v2099 = vunpack.c.l.b16 %v2076
        %v2100 = vunpack.c.l.b16 %v2077
        %v2101 = vunpack.c.l.b16 %v2078
        %v2102 = vunpack.c.l.b16 %v2079
        %v2103 = vunpack.c.l.b16 %v2080
        %v2104 = vunpack.c.l.b16 %v2081
        %v2105 = vunpack.c.l.b16 %v2082
        %v2106 = vpack.c.b16 %v2099, %v2098
        %v2107 = vpack.c.b16 %v2101, %v2100
        %v2108 = vpack.c.b16 %v2103, %v2102
        %v2109 = vpack.c.b16 %v2105, %v2104
        %vm2114 = vcmask 523264
        %v2116 = vsel %vm2114, %v2074, 0
        %2118 = vmatprep.subr.bf16.mxu0 0
        %2119 = vmatpush1.bf16.msra.mxu0 %v2106
        %2120 = vmatprep.subr.bf16.mxu0 0
        %2121 = vmatpush1.bf16.msra.mxu0 %v2107
        %2122 = vmatprep.subr.bf16.mxu0 0
        %2123 = vmatpush1.bf16.msra.mxu0 %v2108
        %2124 = vmatprep.subr.bf16.mxu0 0
        %2125 = vmatpush1.bf16.msra.mxu0 %v2109
        %2126 = vmatprep.subr.bf16.mxu0 0
        %2127 = vmatpush1.bf16.msra.mxu0 0
        %2128 = vmatprep.subr.bf16.mxu0 0
        %2129 = vmatpush1.bf16.msra.mxu0 0
        %2130 = vmatprep.subr.bf16.mxu0 0
        %2131 = vmatpush1.bf16.msra.mxu0 0
        %2132 = vmatprep.subr.bf16.mxu0 0
        %2133 = vmatpush1.bf16.msra.mxu0 0
        %2134 = vmatprep.subr.bf16.mxu0 0
        %2135 = vmatpush1.bf16.msra.mxu0 0
        %2136 = vmatprep.subr.bf16.mxu0 0
        %2137 = vmatpush1.bf16.msra.mxu0 0
        %2138 = vmatprep.subr.bf16.mxu0 0
        %2139 = vmatpush1.bf16.msra.mxu0 0
        %2140 = vmatprep.subr.bf16.mxu0 0
        %2141 = vmatpush1.bf16.msra.mxu0 0
        %2142 = vmatprep.subr.bf16.mxu0 0
        %2143 = vmatpush1.bf16.msra.mxu0 0
        %2144 = vmatprep.subr.bf16.mxu0 0
        %2145 = vmatpush1.bf16.msra.mxu0 0
        %2146 = vmatprep.subr.bf16.mxu0 0
        %2147 = vmatpush1.bf16.msra.mxu0 0
        %2148 = vmatprep.subr.bf16.mxu0 0
        %2149 = vmatpush1.bf16.msra.mxu0 0
        %2150 = vmatprep.mubr.bf16.mxu0 0
        %2151 = vmatmul.mubr.bf16.gmra.mrb[0].mxu0 %v2116
        %v2152 = vpop.f32.mrb[0].mxu0
        %v2153 = vadd.f32 %v2088, %v2152
        %v2154 = vpop.f32.mrb[0].mxu0
        %v2155 = vpop.f32.mrb[0].mxu0
        %v2156 = vpop.f32.mrb[0].mxu0
        %2157 = vdwg.mxu0
        %v2158 = vadd.f32 %v2153, %v1979
        %v2159 = vld [vmem:[#allocation22] sm:$0x1]
        %v2160 = vld [vmem:[#allocation23] sm:$0x1]
        %v2161 = vsel %vm759, %v2158, 0.0
        %2162 = vadd.xlane.f32.xlu0 %v2161
        %v2163 = vpop.xlane.xlu0 %2162
        %v2164 = vmul.f32 %v2163, %v1955
        %v2165 = vsub.f32 %v2158, %v2164
        %v2166 = vmul.f32 %v2165, %v2165
        %v2167 = vsel %vm759, %v2166, 0.0
        %2168 = vadd.xlane.f32.xlu0 %v2167
        %v2169 = vpop.xlane.xlu0 %2168
        %v2170 = vmul.f32 %v2169, %v1955
        %v2171 = vadd.f32 %v2170, 1e-12
        %v2172 = vrsqrt.pop %v2171
        %v2173 = vmul.f32 %v2165, %v2172
        %v2175 = vlaneseq
        %v2176 = vshrl.u32 %v2175, 7
        %v2177 = vsub.s32 0, %v2176
        %v2178 = vrot.slane %v2159, %v2177
        %v2180 = vmul.f32 %v2173, %v2178
        %v2182 = vlaneseq
        %v2183 = vshrl.u32 %v2182, 7
        %v2184 = vsub.s32 0, %v2183
        %v2185 = vrot.slane %v2160, %v2184
        %v2187 = vadd.f32 %v2180, %v2185
        %2188 = vst.msk [vmem:[%s724] sm:$0xff] %vm759, %v2187
        %s2189 = sand.u32 %s373, 1
        %s2190 = scalar_lea.sflag [#allocation4], %s2189
        %s2191 = sand.u32 %s373, 1
        %s2192 = smul.addr %s2191, 8
        %s2193 = scalar_lea.vmem [#allocation25], %s2192
        %s2194 = sand.u32 %s401, 1
        %s2195 = scalar_lea.sflag [#allocation27], %s2194
        %s2196 = sand.u32 %s401, 1
        %s2197 = smul.addr %s2196, 32
        %s2198 = scalar_lea.vmem [#allocation26], %s2197
        // Predicated region
        $region133: #{bert_layer_pallas.1} parent=75 // pred_check
          %p2199 = pneg %p383
        $region134: #{bert_layer_pallas.1} parent=75 // pred_check_branch
          %2201 = sbr.rel (%p2199) target = $region136
        $region135: #{bert_layer_pallas.1} parent=75 // pred_region
          %s2203 = ssub.s32 128, 128
          %2204 = vsyncadd %s2190, %s2203
          %s2205 = sadd.s32 %s50, %s49
          %s2206 = smul.addr %s2205, 128
          %s2207 = scalar_lea.hbm %s14, %s2206
          %s2209 = sshll.u32 %s2193, 4
          %s2210 = int_to_ptr.vmem [resolvable:$true] %s2209
          %2212 = dma.vmem_to_hbm [thread:$0]  %s2210, 128, %s2207, %s2190
        $region136: #{bert_layer_pallas.1} parent=75 // pred_fallthru
          _
        // Predicated region
        $region137: #{bert_layer_pallas.1} parent=75 // pred_check
          %p2213 = pneg %p411
        $region138: #{bert_layer_pallas.1} parent=75 // pred_check_branch
          %2215 = sbr.rel (%p2213) target = $region140
        $region139: #{bert_layer_pallas.1} parent=75 // pred_region
          %s2217 = ssub.s32 512, 512
          %2218 = vsyncadd %s2195, %s2217
          %s2219 = smul.addr %s49, 4
          %s2220 = sadd.s32 %s50, %s2219
          %s2221 = smul.addr %s2220, 128
          %s2222 = scalar_lea.hbm %s15, %s2221
          %s2223 = sshll.u32 %s2198, 4
          %s2224 = int_to_ptr.vmem [resolvable:$true] %s2223
          %2229 = dma.vmem_to_hbm [thread:$0]  %s2224, 512, %s2222, %s2195, 128, 128, 8
        $region140: #{bert_layer_pallas.1} parent=75 // pred_fallthru
          _
      $region76: #{bert_layer_pallas.1} parent=5 // pred_fallthru
        _
      %p2230 = scmp.le.s32.totalorder 2, %s40
      // Predicated region
      $region141: #{bert_layer_pallas.1} parent=5 // pred_check
        %p2231 = pneg %p2230
      $region142: #{bert_layer_pallas.1} parent=5 // pred_check_branch
        %2233 = sbr.rel (%p2231) target = $region144
      $region143: #{bert_layer_pallas.1} parent=5 // pred_region
        %s2234 = ssub.s32 %s40, 2
        // Predicated region
        $region145: #{bert_layer_pallas.1} parent=143 // pred_check
          %p2235 = pneg %p389
        $region146: #{bert_layer_pallas.1} parent=143 // pred_check_branch
          %2237 = sbr.rel (%p2235) target = $region148
        $region147: #{bert_layer_pallas.1} parent=143 // pred_region
          %s2238 = sand.u32 %s374, 1
          %s2239 = scalar_lea.sflag [#allocation4], %s2238
          %s2240 = sand.u32 %s374, 1
          %s2241 = smul.addr %s2240, 8
          %s2242 = scalar_lea.vmem [#allocation25], %s2241
          %2243 = dma.done %s2239, 128
        $region148: #{bert_layer_pallas.1} parent=143 // pred_fallthru
          _
        // Predicated region
        $region149: #{bert_layer_pallas.1} parent=143 // pred_check
          %p2244 = pneg %p417
        $region150: #{bert_layer_pallas.1} parent=143 // pred_check_branch
          %2246 = sbr.rel (%p2244) target = $region152
        $region151: #{bert_layer_pallas.1} parent=143 // pred_region
          %s2247 = sand.u32 %s402, 1
          %s2248 = scalar_lea.sflag [#allocation27], %s2247
          %s2249 = sand.u32 %s402, 1
          %s2250 = smul.addr %s2249, 32
          %s2251 = scalar_lea.vmem [#allocation26], %s2250
          %2252 = dma.done %s2248, 512
        $region152: #{bert_layer_pallas.1} parent=143 // pred_fallthru
          _
      $region144: #{bert_layer_pallas.1} parent=5 // pred_fallthru
        _
    $region6: #{bert_layer_pallas.1} parent=1 // loop_footer
      %s44 = sadd.s32 1, %s40
    $region7: #{bert_layer_pallas.1} parent=1 // loop_footer_branch
      %39 = sbr.rel target = $region3
    $region8: #{bert_layer_pallas.1} parent=1 // loop_exit
      _
    %2253 = vsyncpa [#allocation3], 1
    %s2254 = scalar_lea.sflag [#allocation3], 1
    %2255 = vsyncpa %s2254, 1
    %2256 = vsyncpa [#allocation6], 1
    %s2257 = scalar_lea.sflag [#allocation6], 1
    %2258 = vsyncpa %s2257, 1
    %2259 = vsyncpa [#allocation9], 1
    %2260 = vsyncpa [#allocation12], 1
    %2261 = vsyncpa [#allocation15], 1
    %2262 = vsyncpa [#allocation18], 1
    %2263 = vsyncpa [#allocation21], 1
    %2264 = vsyncpa [#allocation24], 1
    %2265 = vsyncpa [#allocation4], 1
    %s2266 = scalar_lea.sflag [#allocation4], 1
    %2267 = vsyncpa %s2266, 1
    %2268 = vsyncpa [#allocation27], 1
    %s2269 = scalar_lea.sflag [#allocation27], 1
    %2270 = vsyncpa %s2269, 1

</llo_original>
